<compile_context>
chip_gen: v6e
topology: v6e:2x2x1
jax: 0.10.0
libtpu: 0.0.40
codegen_flags: <defaults>
</compile_context>

<pallas_src>
import functools

import jax
import jax.numpy as jnp
from jax.experimental import pallas as pl
from jax.experimental.pallas import tpu as pltpu


def _round_up(x, m):
    return (x + m - 1) // m * m


def rnn_tile_kernel(xproj_ref, wh_ref, h0_ref, out_ref, state_scr, *,
                    hidden, out_dim, tile_t):
    """TILE_T RNN timesteps per grid iteration; state carried in VMEM scratch.

    Grid = (batch_blocks [parallel], time_blocks [arbitrary]).

    xproj_ref: (TILE_T, block_b, Npad)  hoisted  x@Wx + b  for this time tile
    wh_ref:    (Hpad, Npad)             fused [W_hidden_h | W_out_h]^T
                                        (rows >= hidden are exactly zero)
    h0_ref:    (block_b, Hpad)          initial state for this batch block
    out_ref:   (TILE_T, block_b, Npad)  cols [0:H) = state, [H:H+O) = softmax
    state_scr: (block_b, Hpad)          f32 state carried across time blocks
    """
    tb = pl.program_id(1)  # time-block index (innermost, sequential)

    @pl.when(tb == 0)
    def _():
        state_scr[...] = h0_ref[...]

    block_b = out_ref.shape[1]
    n_pad = out_ref.shape[2]
    h_pad = state_scr.shape[1]

    # Loop-invariant masks, hoisted out of the unrolled per-step loop.
    col_n = jax.lax.broadcasted_iota(jnp.int32, (block_b, n_pad), 1)
    is_logit = (col_n >= hidden) & (col_n < hidden + out_dim)
    is_state = col_n < hidden
    col_h = jax.lax.broadcasted_iota(jnp.int32, (block_b, h_pad), 1)
    keep_state = col_h < hidden

    def step(t, carry):
        h = state_scr[...]                                        # (block_b, Hpad) f32
        # Only this matmul is serial; operands may be bf16, accumulate in f32.
        y = (xproj_ref[t].astype(jnp.float32)
             + jnp.dot(h.astype(wh_ref.dtype), wh_ref[...],
                       preferred_element_type=jnp.float32))        # (block_b, Npad) f32

        # Masked softmax restricted to the logit columns [H, H+O).
        m = jnp.max(jnp.where(is_logit, y, -jnp.inf), axis=-1, keepdims=True)
        e = jnp.exp(jnp.where(is_logit, y - m, -jnp.inf))          # 0 outside logits
        probs = e / jnp.sum(e, axis=-1, keepdims=True)             # exact normalize

        combined = jnp.where(is_state, y, probs)                   # state | probs | 0
        # Carry the new state; zero non-state columns (belt-and-suspenders on
        # top of the "Wh rows >= hidden are zero" invariant).
        state_scr[...] = jnp.where(keep_state, combined[:, :h_pad], 0.0)
        out_ref[t] = combined.astype(out_ref.dtype)
        return carry

    jax.lax.fori_loop(0, tile_t, step, 0, unroll=True)


def prepare_params(w_hidden, b_hidden, w_out, b_out, input_size,
                   mxu_dtype=jnp.float32):
    """One-time weight repack: split / transpose / fuse / zero-pad.

    PyTorch Linear weights are (out_features, in_features) with
    in = [input, prev_state]  (all_input = cat((input, prev_state), 1)).
    """
    hidden = w_hidden.shape[0]
    out_dim = w_out.shape[0]
    d_in = input_size
    h_pad = _round_up(hidden, 128)
    n_pad = _round_up(hidden + out_dim, 128)

    w_hx = w_hidden[:, :d_in].T          # (Din, H)
    w_hh = w_hidden[:, d_in:].T          # (H,   H)
    w_ox = w_out[:, :d_in].T             # (Din, O)
    w_oh = w_out[:, d_in:].T             # (H,   O)

    # Un-padded fused input projection weight (used by the hoisted big matmul
    # in the wrapper -> no d_in->128 zero-pad HBM inflation).
    wx = jnp.concatenate([w_hx, w_ox], axis=1).astype(mxu_dtype)   # (Din, H+O)
    b = jnp.concatenate([b_hidden, b_out]).astype(jnp.float32)     # (H+O,)

    # Recurrent weight, (Hpad, Npad).  INVARIANT relied on by the kernel:
    # rows [hidden:h_pad) are exactly zero so any non-state columns riding
    # along in the carried slab are inert (the kernel also masks them).
    wh = jnp.concatenate([w_hh, w_oh], axis=1)                     # (H, H+O)
    wh_pad = (jnp.zeros((h_pad, n_pad), mxu_dtype)
              .at[:hidden, :hidden + out_dim].set(wh.astype(mxu_dtype)))

    return dict(wx=wx, wh=wh_pad, b=b,
                hidden=hidden, out_dim=out_dim, input_size=d_in,
                h_pad=h_pad, n_pad=n_pad, dtype=mxu_dtype)


def rnn_sequence(xs, prev_state, params, tile_t=8):
    """Run T fused RNN steps: hoisted x-projection + one serial Pallas kernel.

    xs:         (T, B, input_size)
    prev_state: (B, hidden)
    returns (states, outputs): (T, B, hidden), (T, B, out_dim)
    """
    T, B, _ = xs.shape
    hidden = params["hidden"]
    out_dim = params["out_dim"]
    n_real = hidden + out_dim
    h_pad = params["h_pad"]
    n_pad = params["n_pad"]
    cdt = params["dtype"]

    tile_t = max(1, min(tile_t, T))
    t_pad = _round_up(T, tile_t)

    b_pad = max(8, _round_up(B, 8))
    if b_pad > 128:                       # large batches: 128-row blocks, the
        b_pad = _round_up(b_pad, 128)     # leading grid axis is "parallel"
        block_b = 128                     # (sharded across v7x's two TCs).
    else:
        block_b = b_pad

    # --- Hoisted, throughput-shaped input projection (+ bias) over ALL T. ---
    # Only h@Wh is actually serial; this fills the MXU with T*B rows at once.
    xproj = jnp.einsum("tbd,dn->tbn", xs.astype(cdt), params["wx"],
                       preferred_element_type=jnp.float32) + params["b"]
    xproj_p = (jnp.zeros((t_pad, b_pad, n_pad), cdt)
               .at[:T, :B, :n_real].set(xproj.astype(cdt)))
    h0_p = (jnp.zeros((b_pad, h_pad), jnp.float32)
            .at[:B, :hidden].set(prev_state.astype(jnp.float32)))

    grid = (b_pad // block_b, t_pad // tile_t)

    out_slab = pl.pallas_call(
        functools.partial(rnn_tile_kernel, hidden=hidden, out_dim=out_dim,
                          tile_t=tile_t),
        out_shape=jax.ShapeDtypeStruct((t_pad, b_pad, n_pad), jnp.float32),
        grid=grid,
        in_specs=[
            # per-(batch-block, time-block) xproj tile
            pl.BlockSpec((tile_t, block_b, n_pad), lambda bb, tb: (tb, bb, 0)),
            # resident recurrent weight (constant index_map -> no re-DMA)
            # TODO(synk): on v7x with large hidden, add pipeline_mode=pl.Buffered(1)
            pl.BlockSpec((h_pad, n_pad), lambda bb, tb: (0, 0)),
            # initial state for this batch block
            pl.BlockSpec((block_b, h_pad), lambda bb, tb: (bb, 0)),
        ],
        out_specs=pl.BlockSpec((tile_t, block_b, n_pad), lambda bb, tb: (tb, bb, 0)),
        scratch_shapes=[pltpu.VMEM((block_b, h_pad), jnp.float32)],
        compiler_params=pltpu.CompilerParams(
            dimension_semantics=("parallel", "arbitrary")),  # time carries state
    )(xproj_p, params["wh"], h0_p)

    states = out_slab[:T, :B, :hidden]
    outputs = out_slab[:T, :B, hidden:n_real]
    return states, outputs


def rnn_forward(input_tensor, prev_state, params):
    """Single-step forward matching RNN.forward: returns (curr_state, output)."""
    states, outputs = rnn_sequence(input_tensor[None], prev_state, params, tile_t=1)
    return states[0], outputs[0]


def init_linear_params(key, in_features, out_features):
    """Deterministic nn.Linear-style init: U(-1/sqrt(in), 1/sqrt(in))."""
    kw, kb = jax.random.split(key)
    bound = 1.0 / jnp.sqrt(jnp.float32(in_features))
    w = jax.random.uniform(kw, (out_features, in_features), jnp.float32, -bound, bound)
    b = jax.random.uniform(kb, (out_features,), jnp.float32, -bound, bound)
    return w, b


if __name__ == "__main__":
    batch = 2
    input_size = 16
    hidden_size = 32
    output_size = 8
    seq_len = 8

    key = jax.random.PRNGKey(0)
    k_x, k_h, k_o = jax.random.split(key, 3)

    xs = jax.random.normal(k_x, (seq_len, batch, input_size), jnp.float32)
    prev_state0 = jnp.zeros((batch, hidden_size), jnp.float32)  # get_init_hidden_layer

    w_hidden, b_hidden = init_linear_params(k_h, input_size + hidden_size, hidden_size)
    w_out, b_out = init_linear_params(k_o, input_size + hidden_size, output_size)

    # Pure-JAX stepwise reference (the module's forward applied T times).
    ref_states, ref_outputs = [], []
    h = prev_state0
    for t in range(seq_len):
        all_input = jnp.concatenate([xs[t], h], axis=1)
        h = all_input @ w_hidden.T + b_hidden
        logits = all_input @ w_out.T + b_out
        ref_states.append(h)
        ref_outputs.append(jax.nn.softmax(logits, axis=1))
    ref_states = jnp.stack(ref_states)
    ref_outputs = jnp.stack(ref_outputs)

    # --- f32 variant: tight correctness check of the kernel logic. ---
    params_f32 = prepare_params(w_hidden, b_hidden, w_out, b_out, input_size,
                                mxu_dtype=jnp.float32)
    states, outputs = rnn_sequence(xs, prev_state0, params_f32, tile_t=8)
    jax.block_until_ready((states, outputs))
    assert states.shape == (seq_len, batch, hidden_size)
    assert outputs.shape == (seq_len, batch, output_size)
    assert jnp.allclose(states, ref_states, atol=1e-4), \
        float(jnp.max(jnp.abs(states - ref_states)))
    assert jnp.allclose(outputs, ref_outputs, atol=1e-4), \
        float(jnp.max(jnp.abs(outputs - ref_outputs)))

    # Single-step API equivalent to RNN.forward(input_tensor, prev_state).
    curr_state, output = rnn_forward(xs[0], prev_state0, params_f32)
    jax.block_until_ready((curr_state, output))
    assert curr_state.shape == (batch, hidden_size)
    assert output.shape == (batch, output_size)
    assert jnp.allclose(curr_state, ref_states[0], atol=1e-4)
    assert jnp.allclose(output, ref_outputs[0], atol=1e-4)

    # --- bf16-MXU variant (v6e/v7x throughput path): loose numeric check. ---
    params_bf16 = prepare_params(w_hidden, b_hidden, w_out, b_out, input_size,
                                 mxu_dtype=jnp.bfloat16)
    states_bf, outputs_bf = rnn_sequence(xs, prev_state0, params_bf16, tile_t=8)
    jax.block_until_ready((states_bf, outputs_bf))
    assert jnp.allclose(states_bf, ref_states, atol=1.5e-1, rtol=2e-2), \
        float(jnp.max(jnp.abs(states_bf - ref_states)))
    assert jnp.allclose(outputs_bf, ref_outputs, atol=3e-2), \
        float(jnp.max(jnp.abs(outputs_bf - ref_outputs)))

    print("KERNEL_OK")
</pallas_src>

<mosaic_0001>
module attributes {stable_mosaic.version = 11 : i64} {
  func.func @rnn_tile_kernel(%arg0: i32, %arg1: i32, %arg2: memref<8x8x128xf32, #tpu.memory_space<vmem>>, %arg3: memref<128x128xf32, #tpu.memory_space<vmem>>, %arg4: memref<8x128xf32, #tpu.memory_space<vmem>>, %arg5: memref<8x8x128xf32, #tpu.memory_space<vmem>>, %arg6: memref<8x128xf32, #tpu.memory_space<vmem>>) attributes {dimension_semantics = [#tpu.dimension_semantics<parallel>, #tpu.dimension_semantics<arbitrary>], iteration_bounds = array<i64: 1, 1>, scalar_prefetch = 0 : i64, scratch_operands = 1 : i64, tpu.core_type = #tpu.core_type<tc>, window_params = [{transform_indices = @transform_0, window_bounds = array<i64: 8, 8, 128>}, {pipeline_mode = #tpu.pipeline_mode<synchronous>, transform_indices = @transform_1, window_bounds = array<i64: 128, 128>}, {transform_indices = @transform_2, window_bounds = array<i64: 8, 128>}, {transform_indices = @transform_3, window_bounds = array<i64: 8, 8, 128>}]} {
    %c0_i32 = arith.constant 0 : i32
    %0 = arith.cmpi eq, %arg1, %c0_i32 : i32
    %1 = arith.extui %0 : i1 to i32
    %c0_i32_0 = arith.constant 0 : i32
    %2 = arith.cmpi ne, %1, %c0_i32_0 : i32
    scf.if %2 {
      %c0_130 = arith.constant 0 : index
      %c0_131 = arith.constant 0 : index
      %238 = vector.load %arg4[%c0_130, %c0_131] : memref<8x128xf32, #tpu.memory_space<vmem>>, vector<8x128xf32>
      %c0_132 = arith.constant 0 : index
      %c0_133 = arith.constant 0 : index
      %239 = vector.load %arg6[%c0_132, %c0_133] : memref<8x128xf32, #tpu.memory_space<vmem>>, vector<8x128xf32>
      tpu.vector_store %arg6[%c0_132, %c0_133], %238 {strides = array<i32>} : memref<8x128xf32, #tpu.memory_space<vmem>>, vector<8x128xf32>,
    } else {
    }
    %3 = tpu.iota {dimensions = array<i32: 1>} : vector<8x128xi32>
    %c32_i32 = arith.constant 32 : i32
    %4 = vector.broadcast %c32_i32 : i32 to vector<8x128xi32>
    %5 = arith.cmpi sge, %3, %4 : vector<8x128xi32>
    %c40_i32 = arith.constant 40 : i32
    %6 = vector.broadcast %c40_i32 : i32 to vector<8x128xi32>
    %7 = arith.cmpi slt, %3, %6 : vector<8x128xi32>
    %8 = arith.andi %5, %7 : vector<8x128xi1>
    %c32_i32_1 = arith.constant 32 : i32
    %9 = vector.broadcast %c32_i32_1 : i32 to vector<8x128xi32>
    %10 = arith.cmpi slt, %3, %9 : vector<8x128xi32>
    %11 = tpu.iota {dimensions = array<i32: 1>} : vector<8x128xi32>
    %c32_i32_2 = arith.constant 32 : i32
    %12 = vector.broadcast %c32_i32_2 : i32 to vector<8x128xi32>
    %13 = arith.cmpi slt, %11, %12 : vector<8x128xi32>
    %c0_i32_3 = arith.constant 0 : i32
    %c0 = arith.constant 0 : index
    %c0_4 = arith.constant 0 : index
    %14 = vector.load %arg6[%c0, %c0_4] : memref<8x128xf32, #tpu.memory_space<vmem>>, vector<8x128xf32>
    %15 = arith.index_cast %c0_i32_3 : i32 to index
    %c0_5 = arith.constant 0 : index
    %c0_6 = arith.constant 0 : index
    %16 = vector.load %arg2[%15, %c0_5, %c0_6] : memref<8x8x128xf32, #tpu.memory_space<vmem>>, vector<1x8x128xf32>
    %17 = vector.shape_cast %16 : vector<1x8x128xf32> to vector<8x128xf32>
    %c0_7 = arith.constant 0 : index
    %c0_8 = arith.constant 0 : index
    %18 = vector.load %arg3[%c0_7, %c0_8] : memref<128x128xf32, #tpu.memory_space<vmem>>, vector<128x128xf32>
    %cst = arith.constant dense<0.000000e+00> : vector<8x128xf32>
    %19 = tpu.matmul %14, %18, %cst {dimension_numbers = #tpu.dot_dimension_numbers<[1], [0], [0], [1], [0, 0, 1, 1], [], []>} : vector<8x128xf32>, vector<128x128xf32>, vector<8x128xf32> -> vector<8x128xf32>
    %20 = arith.addf %17, %19 : vector<8x128xf32>
    %cst_9 = arith.constant 0xFF800000 : f32
    %21 = vector.broadcast %cst_9 : f32 to vector<8x128xf32>
    %22 = arith.select %8, %20, %21 : vector<8x128xi1>, vector<8x128xf32>
    %cst_10 = arith.constant dense<0xFF800000> : vector<8xf32>
    %23 = vector.multi_reduction <maximumf>, %22, %cst_10 [1] : vector<8x128xf32> to vector<8xf32>
    %24 = vector.shape_cast %23 : vector<8xf32> to vector<8x1xf32>
    %25 = vector.broadcast %24 : vector<8x1xf32> to vector<8x128xf32>
    %26 = arith.subf %20, %25 : vector<8x128xf32>
    %cst_11 = arith.constant 0xFF800000 : f32
    %27 = vector.broadcast %cst_11 : f32 to vector<8x128xf32>
    %28 = arith.select %8, %26, %27 : vector<8x128xi1>, vector<8x128xf32>
    %29 = math.exp %28 : vector<8x128xf32>
    %cst_12 = arith.constant dense<0.000000e+00> : vector<8xf32>
    %30 = vector.multi_reduction <add>, %29, %cst_12 [1] : vector<8x128xf32> to vector<8xf32>
    %31 = vector.shape_cast %30 : vector<8xf32> to vector<8x1xf32>
    %32 = vector.broadcast %31 : vector<8x1xf32> to vector<8x128xf32>
    %33 = arith.divf %29, %32 : vector<8x128xf32>
    %34 = arith.select %10, %20, %33 : vector<8x128xi1>, vector<8x128xf32>
    %cst_13 = arith.constant 0.000000e+00 : f32
    %35 = vector.broadcast %cst_13 : f32 to vector<8x128xf32>
    %36 = arith.select %13, %34, %35 : vector<8x128xi1>, vector<8x128xf32>
    %c0_14 = arith.constant 0 : index
    %c0_15 = arith.constant 0 : index
    %37 = vector.load %arg6[%c0_14, %c0_15] : memref<8x128xf32, #tpu.memory_space<vmem>>, vector<8x128xf32>
    tpu.vector_store %arg6[%c0_14, %c0_15], %36 {strides = array<i32>} : memref<8x128xf32, #tpu.memory_space<vmem>>, vector<8x128xf32>,
    %38 = arith.index_cast %c0_i32_3 : i32 to index
    %c0_16 = arith.constant 0 : index
    %c0_17 = arith.constant 0 : index
    %39 = vector.load %arg5[%38, %c0_16, %c0_17] : memref<8x8x128xf32, #tpu.memory_space<vmem>>, vector<1x8x128xf32>
    %40 = vector.shape_cast %39 : vector<1x8x128xf32> to vector<8x128xf32>
    %41 = vector.shape_cast %34 : vector<8x128xf32> to vector<1x8x128xf32>
    tpu.vector_store %arg5[%38, %c0_16, %c0_17], %41 {strides = array<i32>} : memref<8x8x128xf32, #tpu.memory_space<vmem>>, vector<1x8x128xf32>,
    %c1_i32 = arith.constant 1 : i32
    %c0_18 = arith.constant 0 : index
    %c0_19 = arith.constant 0 : index
    %42 = vector.load %arg6[%c0_18, %c0_19] : memref<8x128xf32, #tpu.memory_space<vmem>>, vector<8x128xf32>
    %43 = arith.index_cast %c1_i32 : i32 to index
    %c0_20 = arith.constant 0 : index
    %c0_21 = arith.constant 0 : index
    %44 = vector.load %arg2[%43, %c0_20, %c0_21] : memref<8x8x128xf32, #tpu.memory_space<vmem>>, vector<1x8x128xf32>
    %45 = vector.shape_cast %44 : vector<1x8x128xf32> to vector<8x128xf32>
    %c0_22 = arith.constant 0 : index
    %c0_23 = arith.constant 0 : index
    %46 = vector.load %arg3[%c0_22, %c0_23] : memref<128x128xf32, #tpu.memory_space<vmem>>, vector<128x128xf32>
    %cst_24 = arith.constant dense<0.000000e+00> : vector<8x128xf32>
    %47 = tpu.matmul %42, %46, %cst_24 {dimension_numbers = #tpu.dot_dimension_numbers<[1], [0], [0], [1], [0, 0, 1, 1], [], []>} : vector<8x128xf32>, vector<128x128xf32>, vector<8x128xf32> -> vector<8x128xf32>
    %48 = arith.addf %45, %47 : vector<8x128xf32>
    %cst_25 = arith.constant 0xFF800000 : f32
    %49 = vector.broadcast %cst_25 : f32 to vector<8x128xf32>
    %50 = arith.select %8, %48, %49 : vector<8x128xi1>, vector<8x128xf32>
    %cst_26 = arith.constant dense<0xFF800000> : vector<8xf32>
    %51 = vector.multi_reduction <maximumf>, %50, %cst_26 [1] : vector<8x128xf32> to vector<8xf32>
    %52 = vector.shape_cast %51 : vector<8xf32> to vector<8x1xf32>
    %53 = vector.broadcast %52 : vector<8x1xf32> to vector<8x128xf32>
    %54 = arith.subf %48, %53 : vector<8x128xf32>
    %cst_27 = arith.constant 0xFF800000 : f32
    %55 = vector.broadcast %cst_27 : f32 to vector<8x128xf32>
    %56 = arith.select %8, %54, %55 : vector<8x128xi1>, vector<8x128xf32>
    %57 = math.exp %56 : vector<8x128xf32>
    %cst_28 = arith.constant dense<0.000000e+00> : vector<8xf32>
    %58 = vector.multi_reduction <add>, %57, %cst_28 [1] : vector<8x128xf32> to vector<8xf32>
    %59 = vector.shape_cast %58 : vector<8xf32> to vector<8x1xf32>
    %60 = vector.broadcast %59 : vector<8x1xf32> to vector<8x128xf32>
    %61 = arith.divf %57, %60 : vector<8x128xf32>
    %62 = arith.select %10, %48, %61 : vector<8x128xi1>, vector<8x128xf32>
    %cst_29 = arith.constant 0.000000e+00 : f32
    %63 = vector.broadcast %cst_29 : f32 to vector<8x128xf32>
    %64 = arith.select %13, %62, %63 : vector<8x128xi1>, vector<8x128xf32>
    %c0_30 = arith.constant 0 : index
    %c0_31 = arith.constant 0 : index
    %65 = vector.load %arg6[%c0_30, %c0_31] : memref<8x128xf32, #tpu.memory_space<vmem>>, vector<8x128xf32>
    tpu.vector_store %arg6[%c0_30, %c0_31], %64 {strides = array<i32>} : memref<8x128xf32, #tpu.memory_space<vmem>>, vector<8x128xf32>,
    %66 = arith.index_cast %c1_i32 : i32 to index
    %c0_32 = arith.constant 0 : index
    %c0_33 = arith.constant 0 : index
    %67 = vector.load %arg5[%66, %c0_32, %c0_33] : memref<8x8x128xf32, #tpu.memory_space<vmem>>, vector<1x8x128xf32>
    %68 = vector.shape_cast %67 : vector<1x8x128xf32> to vector<8x128xf32>
    %69 = vector.shape_cast %62 : vector<8x128xf32> to vector<1x8x128xf32>
    tpu.vector_store %arg5[%66, %c0_32, %c0_33], %69 {strides = array<i32>} : memref<8x8x128xf32, #tpu.memory_space<vmem>>, vector<1x8x128xf32>,
    %c2_i32 = arith.constant 2 : i32
    %c0_34 = arith.constant 0 : index
    %c0_35 = arith.constant 0 : index
    %70 = vector.load %arg6[%c0_34, %c0_35] : memref<8x128xf32, #tpu.memory_space<vmem>>, vector<8x128xf32>
    %71 = arith.index_cast %c2_i32 : i32 to index
    %c0_36 = arith.constant 0 : index
    %c0_37 = arith.constant 0 : index
    %72 = vector.load %arg2[%71, %c0_36, %c0_37] : memref<8x8x128xf32, #tpu.memory_space<vmem>>, vector<1x8x128xf32>
    %73 = vector.shape_cast %72 : vector<1x8x128xf32> to vector<8x128xf32>
    %c0_38 = arith.constant 0 : index
    %c0_39 = arith.constant 0 : index
    %74 = vector.load %arg3[%c0_38, %c0_39] : memref<128x128xf32, #tpu.memory_space<vmem>>, vector<128x128xf32>
    %cst_40 = arith.constant dense<0.000000e+00> : vector<8x128xf32>
    %75 = tpu.matmul %70, %74, %cst_40 {dimension_numbers = #tpu.dot_dimension_numbers<[1], [0], [0], [1], [0, 0, 1, 1], [], []>} : vector<8x128xf32>, vector<128x128xf32>, vector<8x128xf32> -> vector<8x128xf32>
    %76 = arith.addf %73, %75 : vector<8x128xf32>
    %cst_41 = arith.constant 0xFF800000 : f32
    %77 = vector.broadcast %cst_41 : f32 to vector<8x128xf32>
    %78 = arith.select %8, %76, %77 : vector<8x128xi1>, vector<8x128xf32>
    %cst_42 = arith.constant dense<0xFF800000> : vector<8xf32>
    %79 = vector.multi_reduction <maximumf>, %78, %cst_42 [1] : vector<8x128xf32> to vector<8xf32>
    %80 = vector.shape_cast %79 : vector<8xf32> to vector<8x1xf32>
    %81 = vector.broadcast %80 : vector<8x1xf32> to vector<8x128xf32>
    %82 = arith.subf %76, %81 : vector<8x128xf32>
    %cst_43 = arith.constant 0xFF800000 : f32
    %83 = vector.broadcast %cst_43 : f32 to vector<8x128xf32>
    %84 = arith.select %8, %82, %83 : vector<8x128xi1>, vector<8x128xf32>
    %85 = math.exp %84 : vector<8x128xf32>
    %cst_44 = arith.constant dense<0.000000e+00> : vector<8xf32>
    %86 = vector.multi_reduction <add>, %85, %cst_44 [1] : vector<8x128xf32> to vector<8xf32>
    %87 = vector.shape_cast %86 : vector<8xf32> to vector<8x1xf32>
    %88 = vector.broadcast %87 : vector<8x1xf32> to vector<8x128xf32>
    %89 = arith.divf %85, %88 : vector<8x128xf32>
    %90 = arith.select %10, %76, %89 : vector<8x128xi1>, vector<8x128xf32>
    %cst_45 = arith.constant 0.000000e+00 : f32
    %91 = vector.broadcast %cst_45 : f32 to vector<8x128xf32>
    %92 = arith.select %13, %90, %91 : vector<8x128xi1>, vector<8x128xf32>
    %c0_46 = arith.constant 0 : index
    %c0_47 = arith.constant 0 : index
    %93 = vector.load %arg6[%c0_46, %c0_47] : memref<8x128xf32, #tpu.memory_space<vmem>>, vector<8x128xf32>
    tpu.vector_store %arg6[%c0_46, %c0_47], %92 {strides = array<i32>} : memref<8x128xf32, #tpu.memory_space<vmem>>, vector<8x128xf32>,
    %94 = arith.index_cast %c2_i32 : i32 to index
    %c0_48 = arith.constant 0 : index
    %c0_49 = arith.constant 0 : index
    %95 = vector.load %arg5[%94, %c0_48, %c0_49] : memref<8x8x128xf32, #tpu.memory_space<vmem>>, vector<1x8x128xf32>
    %96 = vector.shape_cast %95 : vector<1x8x128xf32> to vector<8x128xf32>
    %97 = vector.shape_cast %90 : vector<8x128xf32> to vector<1x8x128xf32>
    tpu.vector_store %arg5[%94, %c0_48, %c0_49], %97 {strides = array<i32>} : memref<8x8x128xf32, #tpu.memory_space<vmem>>, vector<1x8x128xf32>,
    %c3_i32 = arith.constant 3 : i32
    %c0_50 = arith.constant 0 : index
    %c0_51 = arith.constant 0 : index
    %98 = vector.load %arg6[%c0_50, %c0_51] : memref<8x128xf32, #tpu.memory_space<vmem>>, vector<8x128xf32>
    %99 = arith.index_cast %c3_i32 : i32 to index
    %c0_52 = arith.constant 0 : index
    %c0_53 = arith.constant 0 : index
    %100 = vector.load %arg2[%99, %c0_52, %c0_53] : memref<8x8x128xf32, #tpu.memory_space<vmem>>, vector<1x8x128xf32>
    %101 = vector.shape_cast %100 : vector<1x8x128xf32> to vector<8x128xf32>
    %c0_54 = arith.constant 0 : index
    %c0_55 = arith.constant 0 : index
    %102 = vector.load %arg3[%c0_54, %c0_55] : memref<128x128xf32, #tpu.memory_space<vmem>>, vector<128x128xf32>
    %cst_56 = arith.constant dense<0.000000e+00> : vector<8x128xf32>
    %103 = tpu.matmul %98, %102, %cst_56 {dimension_numbers = #tpu.dot_dimension_numbers<[1], [0], [0], [1], [0, 0, 1, 1], [], []>} : vector<8x128xf32>, vector<128x128xf32>, vector<8x128xf32> -> vector<8x128xf32>
    %104 = arith.addf %101, %103 : vector<8x128xf32>
    %cst_57 = arith.constant 0xFF800000 : f32
    %105 = vector.broadcast %cst_57 : f32 to vector<8x128xf32>
    %106 = arith.select %8, %104, %105 : vector<8x128xi1>, vector<8x128xf32>
    %cst_58 = arith.constant dense<0xFF800000> : vector<8xf32>
    %107 = vector.multi_reduction <maximumf>, %106, %cst_58 [1] : vector<8x128xf32> to vector<8xf32>
    %108 = vector.shape_cast %107 : vector<8xf32> to vector<8x1xf32>
    %109 = vector.broadcast %108 : vector<8x1xf32> to vector<8x128xf32>
    %110 = arith.subf %104, %109 : vector<8x128xf32>
    %cst_59 = arith.constant 0xFF800000 : f32
    %111 = vector.broadcast %cst_59 : f32 to vector<8x128xf32>
    %112 = arith.select %8, %110, %111 : vector<8x128xi1>, vector<8x128xf32>
    %113 = math.exp %112 : vector<8x128xf32>
    %cst_60 = arith.constant dense<0.000000e+00> : vector<8xf32>
    %114 = vector.multi_reduction <add>, %113, %cst_60 [1] : vector<8x128xf32> to vector<8xf32>
    %115 = vector.shape_cast %114 : vector<8xf32> to vector<8x1xf32>
    %116 = vector.broadcast %115 : vector<8x1xf32> to vector<8x128xf32>
    %117 = arith.divf %113, %116 : vector<8x128xf32>
    %118 = arith.select %10, %104, %117 : vector<8x128xi1>, vector<8x128xf32>
    %cst_61 = arith.constant 0.000000e+00 : f32
    %119 = vector.broadcast %cst_61 : f32 to vector<8x128xf32>
    %120 = arith.select %13, %118, %119 : vector<8x128xi1>, vector<8x128xf32>
    %c0_62 = arith.constant 0 : index
    %c0_63 = arith.constant 0 : index
    %121 = vector.load %arg6[%c0_62, %c0_63] : memref<8x128xf32, #tpu.memory_space<vmem>>, vector<8x128xf32>
    tpu.vector_store %arg6[%c0_62, %c0_63], %120 {strides = array<i32>} : memref<8x128xf32, #tpu.memory_space<vmem>>, vector<8x128xf32>,
    %122 = arith.index_cast %c3_i32 : i32 to index
    %c0_64 = arith.constant 0 : index
    %c0_65 = arith.constant 0 : index
    %123 = vector.load %arg5[%122, %c0_64, %c0_65] : memref<8x8x128xf32, #tpu.memory_space<vmem>>, vector<1x8x128xf32>
    %124 = vector.shape_cast %123 : vector<1x8x128xf32> to vector<8x128xf32>
    %125 = vector.shape_cast %118 : vector<8x128xf32> to vector<1x8x128xf32>
    tpu.vector_store %arg5[%122, %c0_64, %c0_65], %125 {strides = array<i32>} : memref<8x8x128xf32, #tpu.memory_space<vmem>>, vector<1x8x128xf32>,
    %c4_i32 = arith.constant 4 : i32
    %c0_66 = arith.constant 0 : index
    %c0_67 = arith.constant 0 : index
    %126 = vector.load %arg6[%c0_66, %c0_67] : memref<8x128xf32, #tpu.memory_space<vmem>>, vector<8x128xf32>
    %127 = arith.index_cast %c4_i32 : i32 to index
    %c0_68 = arith.constant 0 : index
    %c0_69 = arith.constant 0 : index
    %128 = vector.load %arg2[%127, %c0_68, %c0_69] : memref<8x8x128xf32, #tpu.memory_space<vmem>>, vector<1x8x128xf32>
    %129 = vector.shape_cast %128 : vector<1x8x128xf32> to vector<8x128xf32>
    %c0_70 = arith.constant 0 : index
    %c0_71 = arith.constant 0 : index
    %130 = vector.load %arg3[%c0_70, %c0_71] : memref<128x128xf32, #tpu.memory_space<vmem>>, vector<128x128xf32>
    %cst_72 = arith.constant dense<0.000000e+00> : vector<8x128xf32>
    %131 = tpu.matmul %126, %130, %cst_72 {dimension_numbers = #tpu.dot_dimension_numbers<[1], [0], [0], [1], [0, 0, 1, 1], [], []>} : vector<8x128xf32>, vector<128x128xf32>, vector<8x128xf32> -> vector<8x128xf32>
    %132 = arith.addf %129, %131 : vector<8x128xf32>
    %cst_73 = arith.constant 0xFF800000 : f32
    %133 = vector.broadcast %cst_73 : f32 to vector<8x128xf32>
    %134 = arith.select %8, %132, %133 : vector<8x128xi1>, vector<8x128xf32>
    %cst_74 = arith.constant dense<0xFF800000> : vector<8xf32>
    %135 = vector.multi_reduction <maximumf>, %134, %cst_74 [1] : vector<8x128xf32> to vector<8xf32>
    %136 = vector.shape_cast %135 : vector<8xf32> to vector<8x1xf32>
    %137 = vector.broadcast %136 : vector<8x1xf32> to vector<8x128xf32>
    %138 = arith.subf %132, %137 : vector<8x128xf32>
    %cst_75 = arith.constant 0xFF800000 : f32
    %139 = vector.broadcast %cst_75 : f32 to vector<8x128xf32>
    %140 = arith.select %8, %138, %139 : vector<8x128xi1>, vector<8x128xf32>
    %141 = math.exp %140 : vector<8x128xf32>
    %cst_76 = arith.constant dense<0.000000e+00> : vector<8xf32>
    %142 = vector.multi_reduction <add>, %141, %cst_76 [1] : vector<8x128xf32> to vector<8xf32>
    %143 = vector.shape_cast %142 : vector<8xf32> to vector<8x1xf32>
    %144 = vector.broadcast %143 : vector<8x1xf32> to vector<8x128xf32>
    %145 = arith.divf %141, %144 : vector<8x128xf32>
    %146 = arith.select %10, %132, %145 : vector<8x128xi1>, vector<8x128xf32>
    %cst_77 = arith.constant 0.000000e+00 : f32
    %147 = vector.broadcast %cst_77 : f32 to vector<8x128xf32>
    %148 = arith.select %13, %146, %147 : vector<8x128xi1>, vector<8x128xf32>
    %c0_78 = arith.constant 0 : index
    %c0_79 = arith.constant 0 : index
    %149 = vector.load %arg6[%c0_78, %c0_79] : memref<8x128xf32, #tpu.memory_space<vmem>>, vector<8x128xf32>
    tpu.vector_store %arg6[%c0_78, %c0_79], %148 {strides = array<i32>} : memref<8x128xf32, #tpu.memory_space<vmem>>, vector<8x128xf32>,
    %150 = arith.index_cast %c4_i32 : i32 to index
    %c0_80 = arith.constant 0 : index
    %c0_81 = arith.constant 0 : index
    %151 = vector.load %arg5[%150, %c0_80, %c0_81] : memref<8x8x128xf32, #tpu.memory_space<vmem>>, vector<1x8x128xf32>
    %152 = vector.shape_cast %151 : vector<1x8x128xf32> to vector<8x128xf32>
    %153 = vector.shape_cast %146 : vector<8x128xf32> to vector<1x8x128xf32>
    tpu.vector_store %arg5[%150, %c0_80, %c0_81], %153 {strides = array<i32>} : memref<8x8x128xf32, #tpu.memory_space<vmem>>, vector<1x8x128xf32>,
    %c5_i32 = arith.constant 5 : i32
    %c0_82 = arith.constant 0 : index
    %c0_83 = arith.constant 0 : index
    %154 = vector.load %arg6[%c0_82, %c0_83] : memref<8x128xf32, #tpu.memory_space<vmem>>, vector<8x128xf32>
    %155 = arith.index_cast %c5_i32 : i32 to index
    %c0_84 = arith.constant 0 : index
    %c0_85 = arith.constant 0 : index
    %156 = vector.load %arg2[%155, %c0_84, %c0_85] : memref<8x8x128xf32, #tpu.memory_space<vmem>>, vector<1x8x128xf32>
    %157 = vector.shape_cast %156 : vector<1x8x128xf32> to vector<8x128xf32>
    %c0_86 = arith.constant 0 : index
    %c0_87 = arith.constant 0 : index
    %158 = vector.load %arg3[%c0_86, %c0_87] : memref<128x128xf32, #tpu.memory_space<vmem>>, vector<128x128xf32>
    %cst_88 = arith.constant dense<0.000000e+00> : vector<8x128xf32>
    %159 = tpu.matmul %154, %158, %cst_88 {dimension_numbers = #tpu.dot_dimension_numbers<[1], [0], [0], [1], [0, 0, 1, 1], [], []>} : vector<8x128xf32>, vector<128x128xf32>, vector<8x128xf32> -> vector<8x128xf32>
    %160 = arith.addf %157, %159 : vector<8x128xf32>
    %cst_89 = arith.constant 0xFF800000 : f32
    %161 = vector.broadcast %cst_89 : f32 to vector<8x128xf32>
    %162 = arith.select %8, %160, %161 : vector<8x128xi1>, vector<8x128xf32>
    %cst_90 = arith.constant dense<0xFF800000> : vector<8xf32>
    %163 = vector.multi_reduction <maximumf>, %162, %cst_90 [1] : vector<8x128xf32> to vector<8xf32>
    %164 = vector.shape_cast %163 : vector<8xf32> to vector<8x1xf32>
    %165 = vector.broadcast %164 : vector<8x1xf32> to vector<8x128xf32>
    %166 = arith.subf %160, %165 : vector<8x128xf32>
    %cst_91 = arith.constant 0xFF800000 : f32
    %167 = vector.broadcast %cst_91 : f32 to vector<8x128xf32>
    %168 = arith.select %8, %166, %167 : vector<8x128xi1>, vector<8x128xf32>
    %169 = math.exp %168 : vector<8x128xf32>
    %cst_92 = arith.constant dense<0.000000e+00> : vector<8xf32>
    %170 = vector.multi_reduction <add>, %169, %cst_92 [1] : vector<8x128xf32> to vector<8xf32>
    %171 = vector.shape_cast %170 : vector<8xf32> to vector<8x1xf32>
    %172 = vector.broadcast %171 : vector<8x1xf32> to vector<8x128xf32>
    %173 = arith.divf %169, %172 : vector<8x128xf32>
    %174 = arith.select %10, %160, %173 : vector<8x128xi1>, vector<8x128xf32>
    %cst_93 = arith.constant 0.000000e+00 : f32
    %175 = vector.broadcast %cst_93 : f32 to vector<8x128xf32>
    %176 = arith.select %13, %174, %175 : vector<8x128xi1>, vector<8x128xf32>
    %c0_94 = arith.constant 0 : index
    %c0_95 = arith.constant 0 : index
    %177 = vector.load %arg6[%c0_94, %c0_95] : memref<8x128xf32, #tpu.memory_space<vmem>>, vector<8x128xf32>
    tpu.vector_store %arg6[%c0_94, %c0_95], %176 {strides = array<i32>} : memref<8x128xf32, #tpu.memory_space<vmem>>, vector<8x128xf32>,
    %178 = arith.index_cast %c5_i32 : i32 to index
    %c0_96 = arith.constant 0 : index
    %c0_97 = arith.constant 0 : index
    %179 = vector.load %arg5[%178, %c0_96, %c0_97] : memref<8x8x128xf32, #tpu.memory_space<vmem>>, vector<1x8x128xf32>
    %180 = vector.shape_cast %179 : vector<1x8x128xf32> to vector<8x128xf32>
    %181 = vector.shape_cast %174 : vector<8x128xf32> to vector<1x8x128xf32>
    tpu.vector_store %arg5[%178, %c0_96, %c0_97], %181 {strides = array<i32>} : memref<8x8x128xf32, #tpu.memory_space<vmem>>, vector<1x8x128xf32>,
    %c6_i32 = arith.constant 6 : i32
    %c0_98 = arith.constant 0 : index
    %c0_99 = arith.constant 0 : index
    %182 = vector.load %arg6[%c0_98, %c0_99] : memref<8x128xf32, #tpu.memory_space<vmem>>, vector<8x128xf32>
    %183 = arith.index_cast %c6_i32 : i32 to index
    %c0_100 = arith.constant 0 : index
    %c0_101 = arith.constant 0 : index
    %184 = vector.load %arg2[%183, %c0_100, %c0_101] : memref<8x8x128xf32, #tpu.memory_space<vmem>>, vector<1x8x128xf32>
    %185 = vector.shape_cast %184 : vector<1x8x128xf32> to vector<8x128xf32>
    %c0_102 = arith.constant 0 : index
    %c0_103 = arith.constant 0 : index
    %186 = vector.load %arg3[%c0_102, %c0_103] : memref<128x128xf32, #tpu.memory_space<vmem>>, vector<128x128xf32>
    %cst_104 = arith.constant dense<0.000000e+00> : vector<8x128xf32>
    %187 = tpu.matmul %182, %186, %cst_104 {dimension_numbers = #tpu.dot_dimension_numbers<[1], [0], [0], [1], [0, 0, 1, 1], [], []>} : vector<8x128xf32>, vector<128x128xf32>, vector<8x128xf32> -> vector<8x128xf32>
    %188 = arith.addf %185, %187 : vector<8x128xf32>
    %cst_105 = arith.constant 0xFF800000 : f32
    %189 = vector.broadcast %cst_105 : f32 to vector<8x128xf32>
    %190 = arith.select %8, %188, %189 : vector<8x128xi1>, vector<8x128xf32>
    %cst_106 = arith.constant dense<0xFF800000> : vector<8xf32>
    %191 = vector.multi_reduction <maximumf>, %190, %cst_106 [1] : vector<8x128xf32> to vector<8xf32>
    %192 = vector.shape_cast %191 : vector<8xf32> to vector<8x1xf32>
    %193 = vector.broadcast %192 : vector<8x1xf32> to vector<8x128xf32>
    %194 = arith.subf %188, %193 : vector<8x128xf32>
    %cst_107 = arith.constant 0xFF800000 : f32
    %195 = vector.broadcast %cst_107 : f32 to vector<8x128xf32>
    %196 = arith.select %8, %194, %195 : vector<8x128xi1>, vector<8x128xf32>
    %197 = math.exp %196 : vector<8x128xf32>
    %cst_108 = arith.constant dense<0.000000e+00> : vector<8xf32>
    %198 = vector.multi_reduction <add>, %197, %cst_108 [1] : vector<8x128xf32> to vector<8xf32>
    %199 = vector.shape_cast %198 : vector<8xf32> to vector<8x1xf32>
    %200 = vector.broadcast %199 : vector<8x1xf32> to vector<8x128xf32>
    %201 = arith.divf %197, %200 : vector<8x128xf32>
    %202 = arith.select %10, %188, %201 : vector<8x128xi1>, vector<8x128xf32>
    %cst_109 = arith.constant 0.000000e+00 : f32
    %203 = vector.broadcast %cst_109 : f32 to vector<8x128xf32>
    %204 = arith.select %13, %202, %203 : vector<8x128xi1>, vector<8x128xf32>
    %c0_110 = arith.constant 0 : index
    %c0_111 = arith.constant 0 : index
    %205 = vector.load %arg6[%c0_110, %c0_111] : memref<8x128xf32, #tpu.memory_space<vmem>>, vector<8x128xf32>
    tpu.vector_store %arg6[%c0_110, %c0_111], %204 {strides = array<i32>} : memref<8x128xf32, #tpu.memory_space<vmem>>, vector<8x128xf32>,
    %206 = arith.index_cast %c6_i32 : i32 to index
    %c0_112 = arith.constant 0 : index
    %c0_113 = arith.constant 0 : index
    %207 = vector.load %arg5[%206, %c0_112, %c0_113] : memref<8x8x128xf32, #tpu.memory_space<vmem>>, vector<1x8x128xf32>
    %208 = vector.shape_cast %207 : vector<1x8x128xf32> to vector<8x128xf32>
    %209 = vector.shape_cast %202 : vector<8x128xf32> to vector<1x8x128xf32>
    tpu.vector_store %arg5[%206, %c0_112, %c0_113], %209 {strides = array<i32>} : memref<8x8x128xf32, #tpu.memory_space<vmem>>, vector<1x8x128xf32>,
    %c7_i32 = arith.constant 7 : i32
    %c0_114 = arith.constant 0 : index
    %c0_115 = arith.constant 0 : index
    %210 = vector.load %arg6[%c0_114, %c0_115] : memref<8x128xf32, #tpu.memory_space<vmem>>, vector<8x128xf32>
    %211 = arith.index_cast %c7_i32 : i32 to index
    %c0_116 = arith.constant 0 : index
    %c0_117 = arith.constant 0 : index
    %212 = vector.load %arg2[%211, %c0_116, %c0_117] : memref<8x8x128xf32, #tpu.memory_space<vmem>>, vector<1x8x128xf32>
    %213 = vector.shape_cast %212 : vector<1x8x128xf32> to vector<8x128xf32>
    %c0_118 = arith.constant 0 : index
    %c0_119 = arith.constant 0 : index
    %214 = vector.load %arg3[%c0_118, %c0_119] : memref<128x128xf32, #tpu.memory_space<vmem>>, vector<128x128xf32>
    %cst_120 = arith.constant dense<0.000000e+00> : vector<8x128xf32>
    %215 = tpu.matmul %210, %214, %cst_120 {dimension_numbers = #tpu.dot_dimension_numbers<[1], [0], [0], [1], [0, 0, 1, 1], [], []>} : vector<8x128xf32>, vector<128x128xf32>, vector<8x128xf32> -> vector<8x128xf32>
    %216 = arith.addf %213, %215 : vector<8x128xf32>
    %cst_121 = arith.constant 0xFF800000 : f32
    %217 = vector.broadcast %cst_121 : f32 to vector<8x128xf32>
    %218 = arith.select %8, %216, %217 : vector<8x128xi1>, vector<8x128xf32>
    %cst_122 = arith.constant dense<0xFF800000> : vector<8xf32>
    %219 = vector.multi_reduction <maximumf>, %218, %cst_122 [1] : vector<8x128xf32> to vector<8xf32>
    %220 = vector.shape_cast %219 : vector<8xf32> to vector<8x1xf32>
    %221 = vector.broadcast %220 : vector<8x1xf32> to vector<8x128xf32>
    %222 = arith.subf %216, %221 : vector<8x128xf32>
    %cst_123 = arith.constant 0xFF800000 : f32
    %223 = vector.broadcast %cst_123 : f32 to vector<8x128xf32>
    %224 = arith.select %8, %222, %223 : vector<8x128xi1>, vector<8x128xf32>
    %225 = math.exp %224 : vector<8x128xf32>
    %cst_124 = arith.constant dense<0.000000e+00> : vector<8xf32>
    %226 = vector.multi_reduction <add>, %225, %cst_124 [1] : vector<8x128xf32> to vector<8xf32>
    %227 = vector.shape_cast %226 : vector<8xf32> to vector<8x1xf32>
    %228 = vector.broadcast %227 : vector<8x1xf32> to vector<8x128xf32>
    %229 = arith.divf %225, %228 : vector<8x128xf32>
    %230 = arith.select %10, %216, %229 : vector<8x128xi1>, vector<8x128xf32>
    %cst_125 = arith.constant 0.000000e+00 : f32
    %231 = vector.broadcast %cst_125 : f32 to vector<8x128xf32>
    %232 = arith.select %13, %230, %231 : vector<8x128xi1>, vector<8x128xf32>
    %c0_126 = arith.constant 0 : index
    %c0_127 = arith.constant 0 : index
    %233 = vector.load %arg6[%c0_126, %c0_127] : memref<8x128xf32, #tpu.memory_space<vmem>>, vector<8x128xf32>
    tpu.vector_store %arg6[%c0_126, %c0_127], %232 {strides = array<i32>} : memref<8x128xf32, #tpu.memory_space<vmem>>, vector<8x128xf32>,
    %234 = arith.index_cast %c7_i32 : i32 to index
    %c0_128 = arith.constant 0 : index
    %c0_129 = arith.constant 0 : index
    %235 = vector.load %arg5[%234, %c0_128, %c0_129] : memref<8x8x128xf32, #tpu.memory_space<vmem>>, vector<1x8x128xf32>
    %236 = vector.shape_cast %235 : vector<1x8x128xf32> to vector<8x128xf32>
    %237 = vector.shape_cast %230 : vector<8x128xf32> to vector<1x8x128xf32>
    tpu.vector_store %arg5[%234, %c0_128, %c0_129], %237 {strides = array<i32>} : memref<8x8x128xf32, #tpu.memory_space<vmem>>, vector<1x8x128xf32>,
    %c8_i32 = arith.constant 8 : i32
    return
  }
  func.func @transform_0(%arg0: i32, %arg1: i32) -> (i32, i32, i32) {
    %c0_i32 = arith.constant 0 : i32
    %c0_i32_0 = arith.constant 0 : i32
    return %arg1, %arg0, %c0_i32 : i32, i32, i32
  }
  func.func @transform_1(%arg0: i32, %arg1: i32) -> (i32, i32) {
    %c0_i32 = arith.constant 0 : i32
    %c0_i32_0 = arith.constant 0 : i32
    %c0_i32_1 = arith.constant 0 : i32
    return %c0_i32, %c0_i32_0 : i32, i32
  }
  func.func @transform_2(%arg0: i32, %arg1: i32) -> (i32, i32) {
    %c0_i32 = arith.constant 0 : i32
    %c0_i32_0 = arith.constant 0 : i32
    return %arg0, %c0_i32 : i32, i32
  }
  func.func @transform_3(%arg0: i32, %arg1: i32) -> (i32, i32, i32) {
    %c0_i32 = arith.constant 0 : i32
    %c0_i32_0 = arith.constant 0 : i32
    return %arg1, %arg0, %c0_i32 : i32, i32, i32
  }
}

</mosaic_0001>

<llo_original>
// kernel: tpu_custom_call.1
$region0: #{tpu_custom_call.1}
  #allocation0 [shape = 'u32[]', space=smem, size = 0x4, offset = 0x4, fixed_abs, tag = 'smem constant byte address 0x4 - core index']
  #allocation1 [shape = 'u32[144,128]{1,0:T(1,128)}', space=vmem, size = 0x12000, scoped, tag = 'internal scratch']
  #allocation2 [shape = 'f32[8,128]{1,0:T(8,128)}', space=vmem, size = 0x1000, scoped, tag = 'scratch operand']
  %s0 = inlined_call_operand.hbm [shape: f32[8,8,128], index: 0, kind: input, shape index: {}]
  %s1 = inlined_call_operand.hbm [shape: f32[128,128], index: 1, kind: input, shape index: {}]
  %s2 = inlined_call_operand.hbm [shape: f32[8,128], index: 2, kind: input, shape index: {}]
  %s3 = inlined_call_operand.hbm [shape: f32[8,8,128], index: 3, kind: output, shape index: {}]
  %s4 = sld [smem:[#allocation0]]
  $region38: #{tpu_custom_call.1} parent=0
    _
  %s6 = ssub.s32 1, %s4
  %s7 = scalar_select 0, %s6, %s4
  $region1: #{tpu_custom_call.1} parent=0
    #allocation3 [shape = 'u8[32768]{0}', space=vmem, size = 0x8000, scoped, tag = 'input window, operand 0, single buffered']
    #allocation4 [shape = 's32[1]{0}', space=sflag, size = 0x4, scoped, tag = 'scoped memory for tpu_custom_call.1']
    #allocation5 [shape = 's32[1]{0}', space=sflag, size = 0x4, scoped, tag = 'scoped memory for tpu_custom_call.1']
    #allocation6 [shape = 'u8[65536]{0}', space=vmem, size = 0x10000, scoped, tag = 'input window, operand 1, single buffered']
    #allocation7 [shape = 's32[1]{0}', space=sflag, size = 0x4, scoped, tag = 'scoped memory for tpu_custom_call.1']
    #allocation8 [shape = 'u8[4096]{0}', space=vmem, size = 0x1000, scoped, tag = 'input window, operand 2, single buffered']
    #allocation9 [shape = 'u8[32768]{0}', space=vmem, size = 0x8000, scoped, tag = 'output window, operand 0, single buffered']
    %8 = vsyncpa [#allocation4], 0
    %9 = vsyncpa [#allocation7], 0
    %10 = vsyncpa [#allocation5], 0
    // Predicated region
    $region2: #{tpu_custom_call.1} parent=1 // pred_check
      _
    $region3: #{tpu_custom_call.1} parent=1 // pred_check_branch
      %12 = sbr.rel (0) target = $region5
    $region4: #{tpu_custom_call.1} parent=1 // pred_region
      %s14 = ssub.s32 1024, 1024
      %15 = vsyncadd [#allocation4], %s14
      %s16 = sshll.u32 [#allocation3], 4
      %s17 = int_to_ptr.vmem [resolvable:$true] %s16
      %22 = dma.hbm_to_vmem [thread:$0]  %s0, 1024, %s17, [#allocation4], 128, 128, 8
    $region5: #{tpu_custom_call.1} parent=1 // pred_fallthru
      _
    // Predicated region
    $region6: #{tpu_custom_call.1} parent=1 // pred_check
      _
    $region7: #{tpu_custom_call.1} parent=1 // pred_check_branch
      %24 = sbr.rel (0) target = $region9
    $region8: #{tpu_custom_call.1} parent=1 // pred_region
      %s26 = ssub.s32 2048, 2048
      %27 = vsyncadd [#allocation7], %s26
      %s28 = sshll.u32 [#allocation6], 4
      %s29 = int_to_ptr.vmem [resolvable:$true] %s28
      %34 = dma.hbm_to_vmem [thread:$0]  %s1, 2048, %s29, [#allocation7], 128, 128, 8
    $region9: #{tpu_custom_call.1} parent=1 // pred_fallthru
      _
    // Predicated region
    $region10: #{tpu_custom_call.1} parent=1 // pred_check
      _
    $region11: #{tpu_custom_call.1} parent=1 // pred_check_branch
      %36 = sbr.rel (0) target = $region13
    $region12: #{tpu_custom_call.1} parent=1 // pred_region
      %s38 = ssub.s32 128, 128
      %39 = vsyncadd [#allocation7], %s38
      %s41 = sshll.u32 [#allocation8], 4
      %s42 = int_to_ptr.vmem [resolvable:$true] %s41
      %44 = dma.hbm_to_vmem [thread:$0]  %s2, 128, %s42, [#allocation7]
    $region13: #{tpu_custom_call.1} parent=1 // pred_fallthru
      _
    // Predicated region
    $region14: #{tpu_custom_call.1} parent=1 // pred_check
      _
    $region15: #{tpu_custom_call.1} parent=1 // pred_check_branch
      %46 = sbr.rel (0) target = $region17
    $region16: #{tpu_custom_call.1} parent=1 // pred_region
      %47 = dma.done [#allocation4], 1024
    $region17: #{tpu_custom_call.1} parent=1 // pred_fallthru
      _
    // Predicated region
    $region18: #{tpu_custom_call.1} parent=1 // pred_check
      _
    $region19: #{tpu_custom_call.1} parent=1 // pred_check_branch
      %49 = sbr.rel (0) target = $region21
    $region20: #{tpu_custom_call.1} parent=1 // pred_region
      %50 = dma.done [#allocation7], 2048
    $region21: #{tpu_custom_call.1} parent=1 // pred_fallthru
      _
    // Predicated region
    $region22: #{tpu_custom_call.1} parent=1 // pred_check
      _
    $region23: #{tpu_custom_call.1} parent=1 // pred_check_branch
      %52 = sbr.rel (0) target = $region25
    $region24: #{tpu_custom_call.1} parent=1 // pred_region
      %53 = dma.done [#allocation7], 128
    $region25: #{tpu_custom_call.1} parent=1 // pred_fallthru
      _
    %p54 = scmp.eq.s32.totalorder 0, 0
    // Predicated region
    $region26: #{tpu_custom_call.1} parent=1 // pred_check
      %p55 = pneg %p54
    $region27: #{tpu_custom_call.1} parent=1 // pred_check_branch
      %57 = sbr.rel (%p55) target = $region29
    $region28: #{tpu_custom_call.1} parent=1 // pred_region
      %v58 = vld [vmem:[#allocation8] sm:$0xff]
      %59 = vst [vmem:[#allocation2] sm:$0xff] %v58
    $region29: #{tpu_custom_call.1} parent=1 // pred_fallthru
      _
    %v60 = vlaneseq
    %v61 = vand.u32 %v60, 127
    %vm62 = vcmp.ge.s32.totalorder %v61, 32
    %vm63 = vcmp.lt.s32.totalorder %v61, 40
    %vm64 = vmand %vm62, %vm63
    %vm65 = vcmp.lt.s32.totalorder %v61, 32
    %v66 = vld [vmem:[#allocation2] sm:$0xff]
    %v67 = vld [vmem:[#allocation3] sm:$0xff]
    %v68 = vld [vmem:[#allocation6] sm:$0xff]
    %v69 = vld [vmem:[#allocation6 + $0x8] sm:$0xff]
    %v70 = vld [vmem:[#allocation6 + $0x10] sm:$0xff]
    %v71 = vld [vmem:[#allocation6 + $0x18] sm:$0xff]
    %v72 = vld [vmem:[#allocation6 + $0x20] sm:$0xff]
    %v73 = vld [vmem:[#allocation6 + $0x28] sm:$0xff]
    %v74 = vld [vmem:[#allocation6 + $0x30] sm:$0xff]
    %v75 = vld [vmem:[#allocation6 + $0x38] sm:$0xff]
    %v76 = vld [vmem:[#allocation6 + $0x40] sm:$0xff]
    %v77 = vld [vmem:[#allocation6 + $0x48] sm:$0xff]
    %v78 = vld [vmem:[#allocation6 + $0x50] sm:$0xff]
    %v79 = vld [vmem:[#allocation6 + $0x58] sm:$0xff]
    %v80 = vld [vmem:[#allocation6 + $0x60] sm:$0xff]
    %v81 = vld [vmem:[#allocation6 + $0x68] sm:$0xff]
    %v82 = vld [vmem:[#allocation6 + $0x70] sm:$0xff]
    %v83 = vld [vmem:[#allocation6 + $0x78] sm:$0xff]
    %84 = vmatprep.subr.mxu0 0.0
    %85 = vmatpush1.msra.mxu0 %v83
    %86 = vmatprep.subr.mxu0 0.0
    %87 = vmatpush1.msra.mxu0 %v82
    %88 = vmatprep.subr.mxu0 0.0
    %89 = vmatpush1.msra.mxu0 %v81
    %90 = vmatprep.subr.mxu0 0.0
    %91 = vmatpush1.msra.mxu0 %v80
    %92 = vmatprep.subr.mxu0 0.0
    %93 = vmatpush1.msra.mxu0 %v79
    %94 = vmatprep.subr.mxu0 0.0
    %95 = vmatpush1.msra.mxu0 %v78
    %96 = vmatprep.subr.mxu0 0.0
    %97 = vmatpush1.msra.mxu0 %v77
    %98 = vmatprep.subr.mxu0 0.0
    %99 = vmatpush1.msra.mxu0 %v76
    %100 = vmatprep.subr.mxu0 0.0
    %101 = vmatpush1.msra.mxu0 %v75
    %102 = vmatprep.subr.mxu0 0.0
    %103 = vmatpush1.msra.mxu0 %v74
    %104 = vmatprep.subr.mxu0 0.0
    %105 = vmatpush1.msra.mxu0 %v73
    %106 = vmatprep.subr.mxu0 0.0
    %107 = vmatpush1.msra.mxu0 %v72
    %108 = vmatprep.subr.mxu0 0.0
    %109 = vmatpush1.msra.mxu0 %v71
    %110 = vmatprep.subr.mxu0 0.0
    %111 = vmatpush1.msra.mxu0 %v70
    %112 = vmatprep.subr.mxu0 0.0
    %113 = vmatpush1.msra.mxu0 %v69
    %114 = vmatprep.subr.mxu0 0.0
    %115 = vmatpush1.msra.mxu0 %v68
    %116 = vmatprep.subr.mxu0 0.0
    %117 = vmatpush2.msra.mxu0 0.0
    %118 = vmatprep.subr.mxu0 0.0
    %119 = vmatpush2.msra.mxu0 0.0
    %120 = vmatprep.subr.mxu0 0.0
    %121 = vmatpush2.msra.mxu0 0.0
    %122 = vmatprep.subr.mxu0 0.0
    %123 = vmatpush2.msra.mxu0 0.0
    %124 = vmatprep.subr.mxu0 0.0
    %125 = vmatpush2.msra.mxu0 0.0
    %126 = vmatprep.subr.mxu0 0.0
    %127 = vmatpush2.msra.mxu0 0.0
    %128 = vmatprep.subr.mxu0 0.0
    %129 = vmatpush2.msra.mxu0 0.0
    %130 = vmatprep.subr.mxu0 0.0
    %131 = vmatpush2.msra.mxu0 0.0
    %132 = vmatprep.subr.mxu0 0.0
    %133 = vmatpush2.msra.mxu0 0.0
    %134 = vmatprep.subr.mxu0 0.0
    %135 = vmatpush2.msra.mxu0 0.0
    %136 = vmatprep.subr.mxu0 0.0
    %137 = vmatpush2.msra.mxu0 0.0
    %138 = vmatprep.subr.mxu0 0.0
    %139 = vmatpush2.msra.mxu0 0.0
    %140 = vmatprep.subr.mxu0 0.0
    %141 = vmatpush2.msra.mxu0 0.0
    %142 = vmatprep.subr.mxu0 0.0
    %143 = vmatpush2.msra.mxu0 0.0
    %144 = vmatprep.subr.mxu0 0.0
    %145 = vmatpush2.msra.mxu0 0.0
    %146 = vmatprep.subr.mxu0 0.0
    %147 = vmatpush2.msra.mxu0 0.0
    %148 = vmatprep.mubr.f32.mxu0 0.0
    %149 = vmatmul.mubr.f32.gmra.mxu0 %v66
    %v150 = vpop.f32.mrf.mxu0
    %v151 = vadd.f32 0.0, %v150
    %v152 = vpop.f32.mrf.mxu0
    %153 = vdwg.mxu0
    %v154 = vadd.f32 %v67, %v151
    %v155 = vsel %vm64, %v154, -inf
    %156 = vmax.xlane.f32.xlu0 %v155
    %v157 = vpop.xlane.xlu0 %156
    %v158 = vsub.f32 %v154, %v157
    %v159 = vsel %vm64, %v158, -inf
    %v160 = vmul.f32 %v159, 1.442695
    %v161 = vpow.pop %v160
    %162 = vadd.xlane.f32.xlu0 %v161
    %v163 = vpop.xlane.xlu0 %162
    %v164 = vrcp.pop %v163
    %v165 = vmul.f32 %v161, %v164
    %v166 = vsel %vm65, %v154, %v165
    %v167 = vsel %vm65, %v154, 0.0
    %168 = vst [vmem:[#allocation2] sm:$0xff] %v167
    %169 = vst [vmem:[#allocation9] sm:$0xff] %v166
    %v170 = vld [vmem:[#allocation2] sm:$0xff]
    %s171 = scalar_lea.vmem [#allocation3], 8
    %v172 = vld [vmem:[%s171] sm:$0xff]
    %v173 = vld [vmem:[#allocation6] sm:$0xff]
    %v174 = vld [vmem:[#allocation6 + $0x8] sm:$0xff]
    %v175 = vld [vmem:[#allocation6 + $0x10] sm:$0xff]
    %v176 = vld [vmem:[#allocation6 + $0x18] sm:$0xff]
    %v177 = vld [vmem:[#allocation6 + $0x20] sm:$0xff]
    %v178 = vld [vmem:[#allocation6 + $0x28] sm:$0xff]
    %v179 = vld [vmem:[#allocation6 + $0x30] sm:$0xff]
    %v180 = vld [vmem:[#allocation6 + $0x38] sm:$0xff]
    %v181 = vld [vmem:[#allocation6 + $0x40] sm:$0xff]
    %v182 = vld [vmem:[#allocation6 + $0x48] sm:$0xff]
    %v183 = vld [vmem:[#allocation6 + $0x50] sm:$0xff]
    %v184 = vld [vmem:[#allocation6 + $0x58] sm:$0xff]
    %v185 = vld [vmem:[#allocation6 + $0x60] sm:$0xff]
    %v186 = vld [vmem:[#allocation6 + $0x68] sm:$0xff]
    %v187 = vld [vmem:[#allocation6 + $0x70] sm:$0xff]
    %v188 = vld [vmem:[#allocation6 + $0x78] sm:$0xff]
    %189 = vmatprep.subr.mxu0 0.0
    %190 = vmatpush1.msra.mxu0 %v188
    %191 = vmatprep.subr.mxu0 0.0
    %192 = vmatpush1.msra.mxu0 %v187
    %193 = vmatprep.subr.mxu0 0.0
    %194 = vmatpush1.msra.mxu0 %v186
    %195 = vmatprep.subr.mxu0 0.0
    %196 = vmatpush1.msra.mxu0 %v185
    %197 = vmatprep.subr.mxu0 0.0
    %198 = vmatpush1.msra.mxu0 %v184
    %199 = vmatprep.subr.mxu0 0.0
    %200 = vmatpush1.msra.mxu0 %v183
    %201 = vmatprep.subr.mxu0 0.0
    %202 = vmatpush1.msra.mxu0 %v182
    %203 = vmatprep.subr.mxu0 0.0
    %204 = vmatpush1.msra.mxu0 %v181
    %205 = vmatprep.subr.mxu0 0.0
    %206 = vmatpush1.msra.mxu0 %v180
    %207 = vmatprep.subr.mxu0 0.0
    %208 = vmatpush1.msra.mxu0 %v179
    %209 = vmatprep.subr.mxu0 0.0
    %210 = vmatpush1.msra.mxu0 %v178
    %211 = vmatprep.subr.mxu0 0.0
    %212 = vmatpush1.msra.mxu0 %v177
    %213 = vmatprep.subr.mxu0 0.0
    %214 = vmatpush1.msra.mxu0 %v176
    %215 = vmatprep.subr.mxu0 0.0
    %216 = vmatpush1.msra.mxu0 %v175
    %217 = vmatprep.subr.mxu0 0.0
    %218 = vmatpush1.msra.mxu0 %v174
    %219 = vmatprep.subr.mxu0 0.0
    %220 = vmatpush1.msra.mxu0 %v173
    %221 = vmatprep.subr.mxu0 0.0
    %222 = vmatpush2.msra.mxu0 0.0
    %223 = vmatprep.subr.mxu0 0.0
    %224 = vmatpush2.msra.mxu0 0.0
    %225 = vmatprep.subr.mxu0 0.0
    %226 = vmatpush2.msra.mxu0 0.0
    %227 = vmatprep.subr.mxu0 0.0
    %228 = vmatpush2.msra.mxu0 0.0
    %229 = vmatprep.subr.mxu0 0.0
    %230 = vmatpush2.msra.mxu0 0.0
    %231 = vmatprep.subr.mxu0 0.0
    %232 = vmatpush2.msra.mxu0 0.0
    %233 = vmatprep.subr.mxu0 0.0
    %234 = vmatpush2.msra.mxu0 0.0
    %235 = vmatprep.subr.mxu0 0.0
    %236 = vmatpush2.msra.mxu0 0.0
    %237 = vmatprep.subr.mxu0 0.0
    %238 = vmatpush2.msra.mxu0 0.0
    %239 = vmatprep.subr.mxu0 0.0
    %240 = vmatpush2.msra.mxu0 0.0
    %241 = vmatprep.subr.mxu0 0.0
    %242 = vmatpush2.msra.mxu0 0.0
    %243 = vmatprep.subr.mxu0 0.0
    %244 = vmatpush2.msra.mxu0 0.0
    %245 = vmatprep.subr.mxu0 0.0
    %246 = vmatpush2.msra.mxu0 0.0
    %247 = vmatprep.subr.mxu0 0.0
    %248 = vmatpush2.msra.mxu0 0.0
    %249 = vmatprep.subr.mxu0 0.0
    %250 = vmatpush2.msra.mxu0 0.0
    %251 = vmatprep.subr.mxu0 0.0
    %252 = vmatpush2.msra.mxu0 0.0
    %253 = vmatprep.mubr.f32.mxu0 0.0
    %254 = vmatmul.mubr.f32.gmra.mxu0 %v170
    %v255 = vpop.f32.mrf.mxu0
    %v256 = vadd.f32 0.0, %v255
    %v257 = vpop.f32.mrf.mxu0
    %258 = vdwg.mxu0
    %v259 = vadd.f32 %v172, %v256
    %v260 = vsel %vm64, %v259, -inf
    %261 = vmax.xlane.f32.xlu0 %v260
    %v262 = vpop.xlane.xlu0 %261
    %v263 = vsub.f32 %v259, %v262
    %v264 = vsel %vm64, %v263, -inf
    %v265 = vmul.f32 %v264, 1.442695
    %v266 = vpow.pop %v265
    %267 = vadd.xlane.f32.xlu0 %v266
    %v268 = vpop.xlane.xlu0 %267
    %v269 = vrcp.pop %v268
    %v270 = vmul.f32 %v266, %v269
    %v271 = vsel %vm65, %v259, %v270
    %v272 = vsel %vm65, %v259, 0.0
    %273 = vst [vmem:[#allocation2] sm:$0xff] %v272
    %s274 = scalar_lea.vmem [#allocation9], 8
    %275 = vst [vmem:[%s274] sm:$0xff] %v271
    %v276 = vld [vmem:[#allocation2] sm:$0xff]
    %s277 = scalar_lea.vmem [#allocation3], 16
    %v278 = vld [vmem:[%s277] sm:$0xff]
    %v279 = vld [vmem:[#allocation6] sm:$0xff]
    %v280 = vld [vmem:[#allocation6 + $0x8] sm:$0xff]
    %v281 = vld [vmem:[#allocation6 + $0x10] sm:$0xff]
    %v282 = vld [vmem:[#allocation6 + $0x18] sm:$0xff]
    %v283 = vld [vmem:[#allocation6 + $0x20] sm:$0xff]
    %v284 = vld [vmem:[#allocation6 + $0x28] sm:$0xff]
    %v285 = vld [vmem:[#allocation6 + $0x30] sm:$0xff]
    %v286 = vld [vmem:[#allocation6 + $0x38] sm:$0xff]
    %v287 = vld [vmem:[#allocation6 + $0x40] sm:$0xff]
    %v288 = vld [vmem:[#allocation6 + $0x48] sm:$0xff]
    %v289 = vld [vmem:[#allocation6 + $0x50] sm:$0xff]
    %v290 = vld [vmem:[#allocation6 + $0x58] sm:$0xff]
    %v291 = vld [vmem:[#allocation6 + $0x60] sm:$0xff]
    %v292 = vld [vmem:[#allocation6 + $0x68] sm:$0xff]
    %v293 = vld [vmem:[#allocation6 + $0x70] sm:$0xff]
    %v294 = vld [vmem:[#allocation6 + $0x78] sm:$0xff]
    %295 = vmatprep.subr.mxu0 0.0
    %296 = vmatpush1.msra.mxu0 %v294
    %297 = vmatprep.subr.mxu0 0.0
    %298 = vmatpush1.msra.mxu0 %v293
    %299 = vmatprep.subr.mxu0 0.0
    %300 = vmatpush1.msra.mxu0 %v292
    %301 = vmatprep.subr.mxu0 0.0
    %302 = vmatpush1.msra.mxu0 %v291
    %303 = vmatprep.subr.mxu0 0.0
    %304 = vmatpush1.msra.mxu0 %v290
    %305 = vmatprep.subr.mxu0 0.0
    %306 = vmatpush1.msra.mxu0 %v289
    %307 = vmatprep.subr.mxu0 0.0
    %308 = vmatpush1.msra.mxu0 %v288
    %309 = vmatprep.subr.mxu0 0.0
    %310 = vmatpush1.msra.mxu0 %v287
    %311 = vmatprep.subr.mxu0 0.0
    %312 = vmatpush1.msra.mxu0 %v286
    %313 = vmatprep.subr.mxu0 0.0
    %314 = vmatpush1.msra.mxu0 %v285
    %315 = vmatprep.subr.mxu0 0.0
    %316 = vmatpush1.msra.mxu0 %v284
    %317 = vmatprep.subr.mxu0 0.0
    %318 = vmatpush1.msra.mxu0 %v283
    %319 = vmatprep.subr.mxu0 0.0
    %320 = vmatpush1.msra.mxu0 %v282
    %321 = vmatprep.subr.mxu0 0.0
    %322 = vmatpush1.msra.mxu0 %v281
    %323 = vmatprep.subr.mxu0 0.0
    %324 = vmatpush1.msra.mxu0 %v280
    %325 = vmatprep.subr.mxu0 0.0
    %326 = vmatpush1.msra.mxu0 %v279
    %327 = vmatprep.subr.mxu0 0.0
    %328 = vmatpush2.msra.mxu0 0.0
    %329 = vmatprep.subr.mxu0 0.0
    %330 = vmatpush2.msra.mxu0 0.0
    %331 = vmatprep.subr.mxu0 0.0
    %332 = vmatpush2.msra.mxu0 0.0
    %333 = vmatprep.subr.mxu0 0.0
    %334 = vmatpush2.msra.mxu0 0.0
    %335 = vmatprep.subr.mxu0 0.0
    %336 = vmatpush2.msra.mxu0 0.0
    %337 = vmatprep.subr.mxu0 0.0
    %338 = vmatpush2.msra.mxu0 0.0
    %339 = vmatprep.subr.mxu0 0.0
    %340 = vmatpush2.msra.mxu0 0.0
    %341 = vmatprep.subr.mxu0 0.0
    %342 = vmatpush2.msra.mxu0 0.0
    %343 = vmatprep.subr.mxu0 0.0
    %344 = vmatpush2.msra.mxu0 0.0
    %345 = vmatprep.subr.mxu0 0.0
    %346 = vmatpush2.msra.mxu0 0.0
    %347 = vmatprep.subr.mxu0 0.0
    %348 = vmatpush2.msra.mxu0 0.0
    %349 = vmatprep.subr.mxu0 0.0
    %350 = vmatpush2.msra.mxu0 0.0
    %351 = vmatprep.subr.mxu0 0.0
    %352 = vmatpush2.msra.mxu0 0.0
    %353 = vmatprep.subr.mxu0 0.0
    %354 = vmatpush2.msra.mxu0 0.0
    %355 = vmatprep.subr.mxu0 0.0
    %356 = vmatpush2.msra.mxu0 0.0
    %357 = vmatprep.subr.mxu0 0.0
    %358 = vmatpush2.msra.mxu0 0.0
    %359 = vmatprep.mubr.f32.mxu0 0.0
    %360 = vmatmul.mubr.f32.gmra.mxu0 %v276
    %v361 = vpop.f32.mrf.mxu0
    %v362 = vadd.f32 0.0, %v361
    %v363 = vpop.f32.mrf.mxu0
    %364 = vdwg.mxu0
    %v365 = vadd.f32 %v278, %v362
    %v366 = vsel %vm64, %v365, -inf
    %367 = vmax.xlane.f32.xlu0 %v366
    %v368 = vpop.xlane.xlu0 %367
    %v369 = vsub.f32 %v365, %v368
    %v370 = vsel %vm64, %v369, -inf
    %v371 = vmul.f32 %v370, 1.442695
    %v372 = vpow.pop %v371
    %373 = vadd.xlane.f32.xlu0 %v372
    %v374 = vpop.xlane.xlu0 %373
    %v375 = vrcp.pop %v374
    %v376 = vmul.f32 %v372, %v375
    %v377 = vsel %vm65, %v365, %v376
    %v378 = vsel %vm65, %v365, 0.0
    %379 = vst [vmem:[#allocation2] sm:$0xff] %v378
    %s380 = scalar_lea.vmem [#allocation9], 16
    %381 = vst [vmem:[%s380] sm:$0xff] %v377
    %v382 = vld [vmem:[#allocation2] sm:$0xff]
    %s383 = scalar_lea.vmem [#allocation3], 24
    %v384 = vld [vmem:[%s383] sm:$0xff]
    %v385 = vld [vmem:[#allocation6] sm:$0xff]
    %v386 = vld [vmem:[#allocation6 + $0x8] sm:$0xff]
    %v387 = vld [vmem:[#allocation6 + $0x10] sm:$0xff]
    %v388 = vld [vmem:[#allocation6 + $0x18] sm:$0xff]
    %v389 = vld [vmem:[#allocation6 + $0x20] sm:$0xff]
    %v390 = vld [vmem:[#allocation6 + $0x28] sm:$0xff]
    %v391 = vld [vmem:[#allocation6 + $0x30] sm:$0xff]
    %v392 = vld [vmem:[#allocation6 + $0x38] sm:$0xff]
    %v393 = vld [vmem:[#allocation6 + $0x40] sm:$0xff]
    %v394 = vld [vmem:[#allocation6 + $0x48] sm:$0xff]
    %v395 = vld [vmem:[#allocation6 + $0x50] sm:$0xff]
    %v396 = vld [vmem:[#allocation6 + $0x58] sm:$0xff]
    %v397 = vld [vmem:[#allocation6 + $0x60] sm:$0xff]
    %v398 = vld [vmem:[#allocation6 + $0x68] sm:$0xff]
    %v399 = vld [vmem:[#allocation6 + $0x70] sm:$0xff]
    %v400 = vld [vmem:[#allocation6 + $0x78] sm:$0xff]
    %401 = vmatprep.subr.mxu0 0.0
    %402 = vmatpush1.msra.mxu0 %v400
    %403 = vmatprep.subr.mxu0 0.0
    %404 = vmatpush1.msra.mxu0 %v399
    %405 = vmatprep.subr.mxu0 0.0
    %406 = vmatpush1.msra.mxu0 %v398
    %407 = vmatprep.subr.mxu0 0.0
    %408 = vmatpush1.msra.mxu0 %v397
    %409 = vmatprep.subr.mxu0 0.0
    %410 = vmatpush1.msra.mxu0 %v396
    %411 = vmatprep.subr.mxu0 0.0
    %412 = vmatpush1.msra.mxu0 %v395
    %413 = vmatprep.subr.mxu0 0.0
    %414 = vmatpush1.msra.mxu0 %v394
    %415 = vmatprep.subr.mxu0 0.0
    %416 = vmatpush1.msra.mxu0 %v393
    %417 = vmatprep.subr.mxu0 0.0
    %418 = vmatpush1.msra.mxu0 %v392
    %419 = vmatprep.subr.mxu0 0.0
    %420 = vmatpush1.msra.mxu0 %v391
    %421 = vmatprep.subr.mxu0 0.0
    %422 = vmatpush1.msra.mxu0 %v390
    %423 = vmatprep.subr.mxu0 0.0
    %424 = vmatpush1.msra.mxu0 %v389
    %425 = vmatprep.subr.mxu0 0.0
    %426 = vmatpush1.msra.mxu0 %v388
    %427 = vmatprep.subr.mxu0 0.0
    %428 = vmatpush1.msra.mxu0 %v387
    %429 = vmatprep.subr.mxu0 0.0
    %430 = vmatpush1.msra.mxu0 %v386
    %431 = vmatprep.subr.mxu0 0.0
    %432 = vmatpush1.msra.mxu0 %v385
    %433 = vmatprep.subr.mxu0 0.0
    %434 = vmatpush2.msra.mxu0 0.0
    %435 = vmatprep.subr.mxu0 0.0
    %436 = vmatpush2.msra.mxu0 0.0
    %437 = vmatprep.subr.mxu0 0.0
    %438 = vmatpush2.msra.mxu0 0.0
    %439 = vmatprep.subr.mxu0 0.0
    %440 = vmatpush2.msra.mxu0 0.0
    %441 = vmatprep.subr.mxu0 0.0
    %442 = vmatpush2.msra.mxu0 0.0
    %443 = vmatprep.subr.mxu0 0.0
    %444 = vmatpush2.msra.mxu0 0.0
    %445 = vmatprep.subr.mxu0 0.0
    %446 = vmatpush2.msra.mxu0 0.0
    %447 = vmatprep.subr.mxu0 0.0
    %448 = vmatpush2.msra.mxu0 0.0
    %449 = vmatprep.subr.mxu0 0.0
    %450 = vmatpush2.msra.mxu0 0.0
    %451 = vmatprep.subr.mxu0 0.0
    %452 = vmatpush2.msra.mxu0 0.0
    %453 = vmatprep.subr.mxu0 0.0
    %454 = vmatpush2.msra.mxu0 0.0
    %455 = vmatprep.subr.mxu0 0.0
    %456 = vmatpush2.msra.mxu0 0.0
    %457 = vmatprep.subr.mxu0 0.0
    %458 = vmatpush2.msra.mxu0 0.0
    %459 = vmatprep.subr.mxu0 0.0
    %460 = vmatpush2.msra.mxu0 0.0
    %461 = vmatprep.subr.mxu0 0.0
    %462 = vmatpush2.msra.mxu0 0.0
    %463 = vmatprep.subr.mxu0 0.0
    %464 = vmatpush2.msra.mxu0 0.0
    %465 = vmatprep.mubr.f32.mxu0 0.0
    %466 = vmatmul.mubr.f32.gmra.mxu0 %v382
    %v467 = vpop.f32.mrf.mxu0
    %v468 = vadd.f32 0.0, %v467
    %v469 = vpop.f32.mrf.mxu0
    %470 = vdwg.mxu0
    %v471 = vadd.f32 %v384, %v468
    %v472 = vsel %vm64, %v471, -inf
    %473 = vmax.xlane.f32.xlu0 %v472
    %v474 = vpop.xlane.xlu0 %473
    %v475 = vsub.f32 %v471, %v474
    %v476 = vsel %vm64, %v475, -inf
    %v477 = vmul.f32 %v476, 1.442695
    %v478 = vpow.pop %v477
    %479 = vadd.xlane.f32.xlu0 %v478
    %v480 = vpop.xlane.xlu0 %479
    %v481 = vrcp.pop %v480
    %v482 = vmul.f32 %v478, %v481
    %v483 = vsel %vm65, %v471, %v482
    %v484 = vsel %vm65, %v471, 0.0
    %485 = vst [vmem:[#allocation2] sm:$0xff] %v484
    %s486 = scalar_lea.vmem [#allocation9], 24
    %487 = vst [vmem:[%s486] sm:$0xff] %v483
    %v488 = vld [vmem:[#allocation2] sm:$0xff]
    %s489 = scalar_lea.vmem [#allocation3], 32
    %v490 = vld [vmem:[%s489] sm:$0xff]
    %v491 = vld [vmem:[#allocation6] sm:$0xff]
    %v492 = vld [vmem:[#allocation6 + $0x8] sm:$0xff]
    %v493 = vld [vmem:[#allocation6 + $0x10] sm:$0xff]
    %v494 = vld [vmem:[#allocation6 + $0x18] sm:$0xff]
    %v495 = vld [vmem:[#allocation6 + $0x20] sm:$0xff]
    %v496 = vld [vmem:[#allocation6 + $0x28] sm:$0xff]
    %v497 = vld [vmem:[#allocation6 + $0x30] sm:$0xff]
    %v498 = vld [vmem:[#allocation6 + $0x38] sm:$0xff]
    %v499 = vld [vmem:[#allocation6 + $0x40] sm:$0xff]
    %v500 = vld [vmem:[#allocation6 + $0x48] sm:$0xff]
    %v501 = vld [vmem:[#allocation6 + $0x50] sm:$0xff]
    %v502 = vld [vmem:[#allocation6 + $0x58] sm:$0xff]
    %v503 = vld [vmem:[#allocation6 + $0x60] sm:$0xff]
    %v504 = vld [vmem:[#allocation6 + $0x68] sm:$0xff]
    %v505 = vld [vmem:[#allocation6 + $0x70] sm:$0xff]
    %v506 = vld [vmem:[#allocation6 + $0x78] sm:$0xff]
    %507 = vmatprep.subr.mxu0 0.0
    %508 = vmatpush1.msra.mxu0 %v506
    %509 = vmatprep.subr.mxu0 0.0
    %510 = vmatpush1.msra.mxu0 %v505
    %511 = vmatprep.subr.mxu0 0.0
    %512 = vmatpush1.msra.mxu0 %v504
    %513 = vmatprep.subr.mxu0 0.0
    %514 = vmatpush1.msra.mxu0 %v503
    %515 = vmatprep.subr.mxu0 0.0
    %516 = vmatpush1.msra.mxu0 %v502
    %517 = vmatprep.subr.mxu0 0.0
    %518 = vmatpush1.msra.mxu0 %v501
    %519 = vmatprep.subr.mxu0 0.0
    %520 = vmatpush1.msra.mxu0 %v500
    %521 = vmatprep.subr.mxu0 0.0
    %522 = vmatpush1.msra.mxu0 %v499
    %523 = vmatprep.subr.mxu0 0.0
    %524 = vmatpush1.msra.mxu0 %v498
    %525 = vmatprep.subr.mxu0 0.0
    %526 = vmatpush1.msra.mxu0 %v497
    %527 = vmatprep.subr.mxu0 0.0
    %528 = vmatpush1.msra.mxu0 %v496
    %529 = vmatprep.subr.mxu0 0.0
    %530 = vmatpush1.msra.mxu0 %v495
    %531 = vmatprep.subr.mxu0 0.0
    %532 = vmatpush1.msra.mxu0 %v494
    %533 = vmatprep.subr.mxu0 0.0
    %534 = vmatpush1.msra.mxu0 %v493
    %535 = vmatprep.subr.mxu0 0.0
    %536 = vmatpush1.msra.mxu0 %v492
    %537 = vmatprep.subr.mxu0 0.0
    %538 = vmatpush1.msra.mxu0 %v491
    %539 = vmatprep.subr.mxu0 0.0
    %540 = vmatpush2.msra.mxu0 0.0
    %541 = vmatprep.subr.mxu0 0.0
    %542 = vmatpush2.msra.mxu0 0.0
    %543 = vmatprep.subr.mxu0 0.0
    %544 = vmatpush2.msra.mxu0 0.0
    %545 = vmatprep.subr.mxu0 0.0
    %546 = vmatpush2.msra.mxu0 0.0
    %547 = vmatprep.subr.mxu0 0.0
    %548 = vmatpush2.msra.mxu0 0.0
    %549 = vmatprep.subr.mxu0 0.0
    %550 = vmatpush2.msra.mxu0 0.0
    %551 = vmatprep.subr.mxu0 0.0
    %552 = vmatpush2.msra.mxu0 0.0
    %553 = vmatprep.subr.mxu0 0.0
    %554 = vmatpush2.msra.mxu0 0.0
    %555 = vmatprep.subr.mxu0 0.0
    %556 = vmatpush2.msra.mxu0 0.0
    %557 = vmatprep.subr.mxu0 0.0
    %558 = vmatpush2.msra.mxu0 0.0
    %559 = vmatprep.subr.mxu0 0.0
    %560 = vmatpush2.msra.mxu0 0.0
    %561 = vmatprep.subr.mxu0 0.0
    %562 = vmatpush2.msra.mxu0 0.0
    %563 = vmatprep.subr.mxu0 0.0
    %564 = vmatpush2.msra.mxu0 0.0
    %565 = vmatprep.subr.mxu0 0.0
    %566 = vmatpush2.msra.mxu0 0.0
    %567 = vmatprep.subr.mxu0 0.0
    %568 = vmatpush2.msra.mxu0 0.0
    %569 = vmatprep.subr.mxu0 0.0
    %570 = vmatpush2.msra.mxu0 0.0
    %571 = vmatprep.mubr.f32.mxu0 0.0
    %572 = vmatmul.mubr.f32.gmra.mxu0 %v488
    %v573 = vpop.f32.mrf.mxu0
    %v574 = vadd.f32 0.0, %v573
    %v575 = vpop.f32.mrf.mxu0
    %576 = vdwg.mxu0
    %v577 = vadd.f32 %v490, %v574
    %v578 = vsel %vm64, %v577, -inf
    %579 = vmax.xlane.f32.xlu0 %v578
    %v580 = vpop.xlane.xlu0 %579
    %v581 = vsub.f32 %v577, %v580
    %v582 = vsel %vm64, %v581, -inf
    %v583 = vmul.f32 %v582, 1.442695
    %v584 = vpow.pop %v583
    %585 = vadd.xlane.f32.xlu0 %v584
    %v586 = vpop.xlane.xlu0 %585
    %v587 = vrcp.pop %v586
    %v588 = vmul.f32 %v584, %v587
    %v589 = vsel %vm65, %v577, %v588
    %v590 = vsel %vm65, %v577, 0.0
    %591 = vst [vmem:[#allocation2] sm:$0xff] %v590
    %s592 = scalar_lea.vmem [#allocation9], 32
    %593 = vst [vmem:[%s592] sm:$0xff] %v589
    %v594 = vld [vmem:[#allocation2] sm:$0xff]
    %s595 = scalar_lea.vmem [#allocation3], 40
    %v596 = vld [vmem:[%s595] sm:$0xff]
    %v597 = vld [vmem:[#allocation6] sm:$0xff]
    %v598 = vld [vmem:[#allocation6 + $0x8] sm:$0xff]
    %v599 = vld [vmem:[#allocation6 + $0x10] sm:$0xff]
    %v600 = vld [vmem:[#allocation6 + $0x18] sm:$0xff]
    %v601 = vld [vmem:[#allocation6 + $0x20] sm:$0xff]
    %v602 = vld [vmem:[#allocation6 + $0x28] sm:$0xff]
    %v603 = vld [vmem:[#allocation6 + $0x30] sm:$0xff]
    %v604 = vld [vmem:[#allocation6 + $0x38] sm:$0xff]
    %v605 = vld [vmem:[#allocation6 + $0x40] sm:$0xff]
    %v606 = vld [vmem:[#allocation6 + $0x48] sm:$0xff]
    %v607 = vld [vmem:[#allocation6 + $0x50] sm:$0xff]
    %v608 = vld [vmem:[#allocation6 + $0x58] sm:$0xff]
    %v609 = vld [vmem:[#allocation6 + $0x60] sm:$0xff]
    %v610 = vld [vmem:[#allocation6 + $0x68] sm:$0xff]
    %v611 = vld [vmem:[#allocation6 + $0x70] sm:$0xff]
    %v612 = vld [vmem:[#allocation6 + $0x78] sm:$0xff]
    %613 = vmatprep.subr.mxu0 0.0
    %614 = vmatpush1.msra.mxu0 %v612
    %615 = vmatprep.subr.mxu0 0.0
    %616 = vmatpush1.msra.mxu0 %v611
    %617 = vmatprep.subr.mxu0 0.0
    %618 = vmatpush1.msra.mxu0 %v610
    %619 = vmatprep.subr.mxu0 0.0
    %620 = vmatpush1.msra.mxu0 %v609
    %621 = vmatprep.subr.mxu0 0.0
    %622 = vmatpush1.msra.mxu0 %v608
    %623 = vmatprep.subr.mxu0 0.0
    %624 = vmatpush1.msra.mxu0 %v607
    %625 = vmatprep.subr.mxu0 0.0
    %626 = vmatpush1.msra.mxu0 %v606
    %627 = vmatprep.subr.mxu0 0.0
    %628 = vmatpush1.msra.mxu0 %v605
    %629 = vmatprep.subr.mxu0 0.0
    %630 = vmatpush1.msra.mxu0 %v604
    %631 = vmatprep.subr.mxu0 0.0
    %632 = vmatpush1.msra.mxu0 %v603
    %633 = vmatprep.subr.mxu0 0.0
    %634 = vmatpush1.msra.mxu0 %v602
    %635 = vmatprep.subr.mxu0 0.0
    %636 = vmatpush1.msra.mxu0 %v601
    %637 = vmatprep.subr.mxu0 0.0
    %638 = vmatpush1.msra.mxu0 %v600
    %639 = vmatprep.subr.mxu0 0.0
    %640 = vmatpush1.msra.mxu0 %v599
    %641 = vmatprep.subr.mxu0 0.0
    %642 = vmatpush1.msra.mxu0 %v598
    %643 = vmatprep.subr.mxu0 0.0
    %644 = vmatpush1.msra.mxu0 %v597
    %645 = vmatprep.subr.mxu0 0.0
    %646 = vmatpush2.msra.mxu0 0.0
    %647 = vmatprep.subr.mxu0 0.0
    %648 = vmatpush2.msra.mxu0 0.0
    %649 = vmatprep.subr.mxu0 0.0
    %650 = vmatpush2.msra.mxu0 0.0
    %651 = vmatprep.subr.mxu0 0.0
    %652 = vmatpush2.msra.mxu0 0.0
    %653 = vmatprep.subr.mxu0 0.0
    %654 = vmatpush2.msra.mxu0 0.0
    %655 = vmatprep.subr.mxu0 0.0
    %656 = vmatpush2.msra.mxu0 0.0
    %657 = vmatprep.subr.mxu0 0.0
    %658 = vmatpush2.msra.mxu0 0.0
    %659 = vmatprep.subr.mxu0 0.0
    %660 = vmatpush2.msra.mxu0 0.0
    %661 = vmatprep.subr.mxu0 0.0
    %662 = vmatpush2.msra.mxu0 0.0
    %663 = vmatprep.subr.mxu0 0.0
    %664 = vmatpush2.msra.mxu0 0.0
    %665 = vmatprep.subr.mxu0 0.0
    %666 = vmatpush2.msra.mxu0 0.0
    %667 = vmatprep.subr.mxu0 0.0
    %668 = vmatpush2.msra.mxu0 0.0
    %669 = vmatprep.subr.mxu0 0.0
    %670 = vmatpush2.msra.mxu0 0.0
    %671 = vmatprep.subr.mxu0 0.0
    %672 = vmatpush2.msra.mxu0 0.0
    %673 = vmatprep.subr.mxu0 0.0
    %674 = vmatpush2.msra.mxu0 0.0
    %675 = vmatprep.subr.mxu0 0.0
    %676 = vmatpush2.msra.mxu0 0.0
    %677 = vmatprep.mubr.f32.mxu0 0.0
    %678 = vmatmul.mubr.f32.gmra.mxu0 %v594
    %v679 = vpop.f32.mrf.mxu0
    %v680 = vadd.f32 0.0, %v679
    %v681 = vpop.f32.mrf.mxu0
    %682 = vdwg.mxu0
    %v683 = vadd.f32 %v596, %v680
    %v684 = vsel %vm64, %v683, -inf
    %685 = vmax.xlane.f32.xlu0 %v684
    %v686 = vpop.xlane.xlu0 %685
    %v687 = vsub.f32 %v683, %v686
    %v688 = vsel %vm64, %v687, -inf
    %v689 = vmul.f32 %v688, 1.442695
    %v690 = vpow.pop %v689
    %691 = vadd.xlane.f32.xlu0 %v690
    %v692 = vpop.xlane.xlu0 %691
    %v693 = vrcp.pop %v692
    %v694 = vmul.f32 %v690, %v693
    %v695 = vsel %vm65, %v683, %v694
    %v696 = vsel %vm65, %v683, 0.0
    %697 = vst [vmem:[#allocation2] sm:$0xff] %v696
    %s698 = scalar_lea.vmem [#allocation9], 40
    %699 = vst [vmem:[%s698] sm:$0xff] %v695
    %v700 = vld [vmem:[#allocation2] sm:$0xff]
    %s701 = scalar_lea.vmem [#allocation3], 48
    %v702 = vld [vmem:[%s701] sm:$0xff]
    %v703 = vld [vmem:[#allocation6] sm:$0xff]
    %v704 = vld [vmem:[#allocation6 + $0x8] sm:$0xff]
    %v705 = vld [vmem:[#allocation6 + $0x10] sm:$0xff]
    %v706 = vld [vmem:[#allocation6 + $0x18] sm:$0xff]
    %v707 = vld [vmem:[#allocation6 + $0x20] sm:$0xff]
    %v708 = vld [vmem:[#allocation6 + $0x28] sm:$0xff]
    %v709 = vld [vmem:[#allocation6 + $0x30] sm:$0xff]
    %v710 = vld [vmem:[#allocation6 + $0x38] sm:$0xff]
    %v711 = vld [vmem:[#allocation6 + $0x40] sm:$0xff]
    %v712 = vld [vmem:[#allocation6 + $0x48] sm:$0xff]
    %v713 = vld [vmem:[#allocation6 + $0x50] sm:$0xff]
    %v714 = vld [vmem:[#allocation6 + $0x58] sm:$0xff]
    %v715 = vld [vmem:[#allocation6 + $0x60] sm:$0xff]
    %v716 = vld [vmem:[#allocation6 + $0x68] sm:$0xff]
    %v717 = vld [vmem:[#allocation6 + $0x70] sm:$0xff]
    %v718 = vld [vmem:[#allocation6 + $0x78] sm:$0xff]
    %719 = vmatprep.subr.mxu0 0.0
    %720 = vmatpush1.msra.mxu0 %v718
    %721 = vmatprep.subr.mxu0 0.0
    %722 = vmatpush1.msra.mxu0 %v717
    %723 = vmatprep.subr.mxu0 0.0
    %724 = vmatpush1.msra.mxu0 %v716
    %725 = vmatprep.subr.mxu0 0.0
    %726 = vmatpush1.msra.mxu0 %v715
    %727 = vmatprep.subr.mxu0 0.0
    %728 = vmatpush1.msra.mxu0 %v714
    %729 = vmatprep.subr.mxu0 0.0
    %730 = vmatpush1.msra.mxu0 %v713
    %731 = vmatprep.subr.mxu0 0.0
    %732 = vmatpush1.msra.mxu0 %v712
    %733 = vmatprep.subr.mxu0 0.0
    %734 = vmatpush1.msra.mxu0 %v711
    %735 = vmatprep.subr.mxu0 0.0
    %736 = vmatpush1.msra.mxu0 %v710
    %737 = vmatprep.subr.mxu0 0.0
    %738 = vmatpush1.msra.mxu0 %v709
    %739 = vmatprep.subr.mxu0 0.0
    %740 = vmatpush1.msra.mxu0 %v708
    %741 = vmatprep.subr.mxu0 0.0
    %742 = vmatpush1.msra.mxu0 %v707
    %743 = vmatprep.subr.mxu0 0.0
    %744 = vmatpush1.msra.mxu0 %v706
    %745 = vmatprep.subr.mxu0 0.0
    %746 = vmatpush1.msra.mxu0 %v705
    %747 = vmatprep.subr.mxu0 0.0
    %748 = vmatpush1.msra.mxu0 %v704
    %749 = vmatprep.subr.mxu0 0.0
    %750 = vmatpush1.msra.mxu0 %v703
    %751 = vmatprep.subr.mxu0 0.0
    %752 = vmatpush2.msra.mxu0 0.0
    %753 = vmatprep.subr.mxu0 0.0
    %754 = vmatpush2.msra.mxu0 0.0
    %755 = vmatprep.subr.mxu0 0.0
    %756 = vmatpush2.msra.mxu0 0.0
    %757 = vmatprep.subr.mxu0 0.0
    %758 = vmatpush2.msra.mxu0 0.0
    %759 = vmatprep.subr.mxu0 0.0
    %760 = vmatpush2.msra.mxu0 0.0
    %761 = vmatprep.subr.mxu0 0.0
    %762 = vmatpush2.msra.mxu0 0.0
    %763 = vmatprep.subr.mxu0 0.0
    %764 = vmatpush2.msra.mxu0 0.0
    %765 = vmatprep.subr.mxu0 0.0
    %766 = vmatpush2.msra.mxu0 0.0
    %767 = vmatprep.subr.mxu0 0.0
    %768 = vmatpush2.msra.mxu0 0.0
    %769 = vmatprep.subr.mxu0 0.0
    %770 = vmatpush2.msra.mxu0 0.0
    %771 = vmatprep.subr.mxu0 0.0
    %772 = vmatpush2.msra.mxu0 0.0
    %773 = vmatprep.subr.mxu0 0.0
    %774 = vmatpush2.msra.mxu0 0.0
    %775 = vmatprep.subr.mxu0 0.0
    %776 = vmatpush2.msra.mxu0 0.0
    %777 = vmatprep.subr.mxu0 0.0
    %778 = vmatpush2.msra.mxu0 0.0
    %779 = vmatprep.subr.mxu0 0.0
    %780 = vmatpush2.msra.mxu0 0.0
    %781 = vmatprep.subr.mxu0 0.0
    %782 = vmatpush2.msra.mxu0 0.0
    %783 = vmatprep.mubr.f32.mxu0 0.0
    %784 = vmatmul.mubr.f32.gmra.mxu0 %v700
    %v785 = vpop.f32.mrf.mxu0
    %v786 = vadd.f32 0.0, %v785
    %v787 = vpop.f32.mrf.mxu0
    %788 = vdwg.mxu0
    %v789 = vadd.f32 %v702, %v786
    %v790 = vsel %vm64, %v789, -inf
    %791 = vmax.xlane.f32.xlu0 %v790
    %v792 = vpop.xlane.xlu0 %791
    %v793 = vsub.f32 %v789, %v792
    %v794 = vsel %vm64, %v793, -inf
    %v795 = vmul.f32 %v794, 1.442695
    %v796 = vpow.pop %v795
    %797 = vadd.xlane.f32.xlu0 %v796
    %v798 = vpop.xlane.xlu0 %797
    %v799 = vrcp.pop %v798
    %v800 = vmul.f32 %v796, %v799
    %v801 = vsel %vm65, %v789, %v800
    %v802 = vsel %vm65, %v789, 0.0
    %803 = vst [vmem:[#allocation2] sm:$0xff] %v802
    %s804 = scalar_lea.vmem [#allocation9], 48
    %805 = vst [vmem:[%s804] sm:$0xff] %v801
    %v806 = vld [vmem:[#allocation2] sm:$0xff]
    %s807 = scalar_lea.vmem [#allocation3], 56
    %v808 = vld [vmem:[%s807] sm:$0xff]
    %v809 = vld [vmem:[#allocation6] sm:$0xff]
    %v810 = vld [vmem:[#allocation6 + $0x8] sm:$0xff]
    %v811 = vld [vmem:[#allocation6 + $0x10] sm:$0xff]
    %v812 = vld [vmem:[#allocation6 + $0x18] sm:$0xff]
    %v813 = vld [vmem:[#allocation6 + $0x20] sm:$0xff]
    %v814 = vld [vmem:[#allocation6 + $0x28] sm:$0xff]
    %v815 = vld [vmem:[#allocation6 + $0x30] sm:$0xff]
    %v816 = vld [vmem:[#allocation6 + $0x38] sm:$0xff]
    %v817 = vld [vmem:[#allocation6 + $0x40] sm:$0xff]
    %v818 = vld [vmem:[#allocation6 + $0x48] sm:$0xff]
    %v819 = vld [vmem:[#allocation6 + $0x50] sm:$0xff]
    %v820 = vld [vmem:[#allocation6 + $0x58] sm:$0xff]
    %v821 = vld [vmem:[#allocation6 + $0x60] sm:$0xff]
    %v822 = vld [vmem:[#allocation6 + $0x68] sm:$0xff]
    %v823 = vld [vmem:[#allocation6 + $0x70] sm:$0xff]
    %v824 = vld [vmem:[#allocation6 + $0x78] sm:$0xff]
    %825 = vmatprep.subr.mxu0 0.0
    %826 = vmatpush1.msra.mxu0 %v824
    %827 = vmatprep.subr.mxu0 0.0
    %828 = vmatpush1.msra.mxu0 %v823
    %829 = vmatprep.subr.mxu0 0.0
    %830 = vmatpush1.msra.mxu0 %v822
    %831 = vmatprep.subr.mxu0 0.0
    %832 = vmatpush1.msra.mxu0 %v821
    %833 = vmatprep.subr.mxu0 0.0
    %834 = vmatpush1.msra.mxu0 %v820
    %835 = vmatprep.subr.mxu0 0.0
    %836 = vmatpush1.msra.mxu0 %v819
    %837 = vmatprep.subr.mxu0 0.0
    %838 = vmatpush1.msra.mxu0 %v818
    %839 = vmatprep.subr.mxu0 0.0
    %840 = vmatpush1.msra.mxu0 %v817
    %841 = vmatprep.subr.mxu0 0.0
    %842 = vmatpush1.msra.mxu0 %v816
    %843 = vmatprep.subr.mxu0 0.0
    %844 = vmatpush1.msra.mxu0 %v815
    %845 = vmatprep.subr.mxu0 0.0
    %846 = vmatpush1.msra.mxu0 %v814
    %847 = vmatprep.subr.mxu0 0.0
    %848 = vmatpush1.msra.mxu0 %v813
    %849 = vmatprep.subr.mxu0 0.0
    %850 = vmatpush1.msra.mxu0 %v812
    %851 = vmatprep.subr.mxu0 0.0
    %852 = vmatpush1.msra.mxu0 %v811
    %853 = vmatprep.subr.mxu0 0.0
    %854 = vmatpush1.msra.mxu0 %v810
    %855 = vmatprep.subr.mxu0 0.0
    %856 = vmatpush1.msra.mxu0 %v809
    %857 = vmatprep.subr.mxu0 0.0
    %858 = vmatpush2.msra.mxu0 0.0
    %859 = vmatprep.subr.mxu0 0.0
    %860 = vmatpush2.msra.mxu0 0.0
    %861 = vmatprep.subr.mxu0 0.0
    %862 = vmatpush2.msra.mxu0 0.0
    %863 = vmatprep.subr.mxu0 0.0
    %864 = vmatpush2.msra.mxu0 0.0
    %865 = vmatprep.subr.mxu0 0.0
    %866 = vmatpush2.msra.mxu0 0.0
    %867 = vmatprep.subr.mxu0 0.0
    %868 = vmatpush2.msra.mxu0 0.0
    %869 = vmatprep.subr.mxu0 0.0
    %870 = vmatpush2.msra.mxu0 0.0
    %871 = vmatprep.subr.mxu0 0.0
    %872 = vmatpush2.msra.mxu0 0.0
    %873 = vmatprep.subr.mxu0 0.0
    %874 = vmatpush2.msra.mxu0 0.0
    %875 = vmatprep.subr.mxu0 0.0
    %876 = vmatpush2.msra.mxu0 0.0
    %877 = vmatprep.subr.mxu0 0.0
    %878 = vmatpush2.msra.mxu0 0.0
    %879 = vmatprep.subr.mxu0 0.0
    %880 = vmatpush2.msra.mxu0 0.0
    %881 = vmatprep.subr.mxu0 0.0
    %882 = vmatpush2.msra.mxu0 0.0
    %883 = vmatprep.subr.mxu0 0.0
    %884 = vmatpush2.msra.mxu0 0.0
    %885 = vmatprep.subr.mxu0 0.0
    %886 = vmatpush2.msra.mxu0 0.0
    %887 = vmatprep.subr.mxu0 0.0
    %888 = vmatpush2.msra.mxu0 0.0
    %889 = vmatprep.mubr.f32.mxu0 0.0
    %890 = vmatmul.mubr.f32.gmra.mxu0 %v806
    %v891 = vpop.f32.mrf.mxu0
    %v892 = vadd.f32 0.0, %v891
    %v893 = vpop.f32.mrf.mxu0
    %894 = vdwg.mxu0
    %v895 = vadd.f32 %v808, %v892
    %v896 = vsel %vm64, %v895, -inf
    %897 = vmax.xlane.f32.xlu0 %v896
    %v898 = vpop.xlane.xlu0 %897
    %v899 = vsub.f32 %v895, %v898
    %v900 = vsel %vm64, %v899, -inf
    %v901 = vmul.f32 %v900, 1.442695
    %v902 = vpow.pop %v901
    %903 = vadd.xlane.f32.xlu0 %v902
    %v904 = vpop.xlane.xlu0 %903
    %v905 = vrcp.pop %v904
    %v906 = vmul.f32 %v902, %v905
    %v907 = vsel %vm65, %v895, %v906
    %v908 = vsel %vm65, %v895, 0.0
    %909 = vst [vmem:[#allocation2] sm:$0xff] %v908
    %s910 = scalar_lea.vmem [#allocation9], 56
    %911 = vst [vmem:[%s910] sm:$0xff] %v907
    // Predicated region
    $region30: #{tpu_custom_call.1} parent=1 // pred_check
      _
    $region31: #{tpu_custom_call.1} parent=1 // pred_check_branch
      %913 = sbr.rel (0) target = $region33
    $region32: #{tpu_custom_call.1} parent=1 // pred_region
      %s915 = ssub.s32 1024, 1024
      %916 = vsyncadd [#allocation5], %s915
      %s917 = sshll.u32 [#allocation9], 4
      %s918 = int_to_ptr.vmem [resolvable:$true] %s917
      %923 = dma.vmem_to_hbm [thread:$0]  %s918, 1024, %s3, [#allocation5], 128, 128, 8
    $region33: #{tpu_custom_call.1} parent=1 // pred_fallthru
      _
    // Predicated region
    $region34: #{tpu_custom_call.1} parent=1 // pred_check
      _
    $region35: #{tpu_custom_call.1} parent=1 // pred_check_branch
      %925 = sbr.rel (0) target = $region37
    $region36: #{tpu_custom_call.1} parent=1 // pred_region
      %926 = dma.done [#allocation5], 1024
    $region37: #{tpu_custom_call.1} parent=1 // pred_fallthru
      _
    %927 = vsyncpa [#allocation4], 1
    %928 = vsyncpa [#allocation7], 1
    %929 = vsyncpa [#allocation5], 1

</llo_original>
